<compile_context>
chip_gen: v7x
topology: tpu7x:2x2x1
jax: 0.10.0
libtpu: 0.0.40
codegen_flags: <defaults>
</compile_context>

<pallas_src>
import jax
import jax.numpy as jnp
from jax.experimental import pallas as pl
from jax.experimental.pallas import tpu as pltpu

_HIDDEN = 128  # padded lane width for all hidden activations (max real width is 64)

# encoder: n_pixels->64->32->16->8->4, decoder: 4->8->16->32->64->n_pixels
def _layer_dims(n_pixels):
    return [
        (n_pixels, 64), (64, 32), (32, 16), (16, 8), (8, 4),      # encoder
        (4, 8), (8, 16), (16, 32), (32, 64), (64, n_pixels),      # decoder
    ]

# ReLU follows every Linear except the encoder's last (idx 4) and decoder's last (idx 9).
_RELU_AFTER = {0, 1, 2, 3, 5, 6, 7, 8}


def _round_up(x, m):
    return (x + m - 1) // m * m


def _num_tensorcores():
    """Best-effort TensorCore-per-chip count (v7x=2, v5e/v6e=1)."""
    try:
        kind = jax.devices()[0].device_kind.lower()
        if "v7" in kind:
            return 2
    except Exception:
        pass
    try:
        info = pltpu.get_tpu_info()
        for attr in ("num_tensorcores", "tensorcores_per_chip", "num_cores",
                     "cores_per_chip"):
            v = getattr(info, attr, None)
            if v:
                return max(1, int(v))
    except Exception:
        pass
    return 1


# ---------------------------------------------------------------------------
# Kernel
# ---------------------------------------------------------------------------
def ae_kernel(x_ref, w_in_ref, w_mid_ref, w_out_ref, b_hid_ref, b_out_ref, out_ref):
    """Fused 9-layer MLP on one batch tile.

    x_ref    : (tile_b, n_pixels)  bf16  (cast on host)
    w_in_ref : (n_pixels, 128)     bf16  (layer 0, d_out padded to 128)
    w_mid_ref: (7, 128, 128)       bf16  (layers 1..7, zero-padded to 128x128)
    w_out_ref: (128, n_pixels)     bf16  (last layer, d_in padded to 128)
    b_hid_ref: (8, 128)            f32   (biases of layers 0..7, lane-padded)
    b_out_ref: (1, n_pixels)       f32
    out_ref  : (tile_b, n_pixels)  f32
    """
    cdt = w_in_ref.dtype  # bfloat16 compute dtype for MXU operands
    n_mid = w_mid_ref.shape[0]

    # Layer 0: bf16 x bf16 -> f32 accumulate, bias + ReLU in f32, carry bf16.
    h = jnp.dot(x_ref[...], w_in_ref[...], preferred_element_type=jnp.float32)
    h = jnp.maximum(h + b_hid_ref[0:1, :], 0.0).astype(cdt)

    # Middle layers 1..7 (includes the host-fused 8->8 layer), all followed by ReLU.
    for i in range(n_mid):  # static unroll
        h = jnp.dot(h, w_mid_ref[i], preferred_element_type=jnp.float32)
        h = jnp.maximum(h + b_hid_ref[i + 1:i + 2, :], 0.0).astype(cdt)

    # Final layer: bias, NO ReLU, store f32 lane-dense.
    h = jnp.dot(h, w_out_ref[...], preferred_element_type=jnp.float32)
    out_ref[...] = (h + b_out_ref[...]).astype(out_ref.dtype)


# ---------------------------------------------------------------------------
# Host-side param packing (fusion + lane padding + bf16 cast)
# ---------------------------------------------------------------------------
def pack_params(params, n_pixels, compute_dtype=jnp.bfloat16):
    """params: flat [w0, b0, ..., w9, b9]; w_i: (d_in, d_out) f32, b_i: (1, d_out) f32."""
    ws = [params[2 * i] for i in range(10)]
    bs = [params[2 * i + 1] for i in range(10)]

    # Exact algebraic fusion of encoder layer 4 (8->4, no ReLU) with decoder
    # layer 5 (4->8): one 8->8 affine layer.
    w45 = ws[4] @ ws[5]            # (8, 8)
    b45 = bs[4] @ ws[5] + bs[5]    # (1, 8)

    fused_ws = [ws[0], ws[1], ws[2], ws[3], w45, ws[6], ws[7], ws[8], ws[9]]
    fused_bs = [bs[0], bs[1], bs[2], bs[3], b45, bs[6], bs[7], bs[8], bs[9]]

    H = _HIDDEN
    # Layer 0: (n_pixels, 64) -> (n_pixels, 128), zero-pad output lanes.
    w_in = jnp.zeros((n_pixels, H), jnp.float32).at[:, : fused_ws[0].shape[1]].set(fused_ws[0])

    # Middle layers 1..7: each embedded in a zero 128x128 block.
    mids = []
    for w in fused_ws[1:8]:
        d_in, d_out = w.shape
        mids.append(jnp.zeros((H, H), jnp.float32).at[:d_in, :d_out].set(w))
    w_mid = jnp.stack(mids)  # (7, 128, 128)

    # Last layer: (64, n_pixels) -> (128, n_pixels), zero-pad input rows.
    w_out = jnp.zeros((H, n_pixels), jnp.float32).at[: fused_ws[8].shape[0], :].set(fused_ws[8])

    # Hidden biases (layers 0..7), lane-padded to 128; kept in f32.
    b_hid = jnp.zeros((8, H), jnp.float32)
    for i, b in enumerate(fused_bs[:8]):
        b_hid = b_hid.at[i, : b.shape[1]].set(b[0])
    b_out = fused_bs[8]  # (1, n_pixels), f32

    return (w_in.astype(compute_dtype),
            w_mid.astype(compute_dtype),
            w_out.astype(compute_dtype),
            b_hid, b_out)


# ---------------------------------------------------------------------------
# pallas_call wrapper
# ---------------------------------------------------------------------------
def ae_forward(x, packed, *, tile_b=None):
    """x: (B, n_pixels) f32 (or bf16). packed: output of pack_params()."""
    w_in, w_mid, w_out, b_hid, b_out = packed
    B, n_pixels = x.shape
    assert w_in.shape[0] == n_pixels and w_out.shape[1] == n_pixels
    out_dtype = jnp.float32 if x.dtype == jnp.float32 else x.dtype

    # Generation-aware tile selection: one tile per TensorCore (v5e/v6e -> 1,
    # v7x -> 2), rounded up to a sublane multiple. Grid-step count is the main
    # overhead at this problem size, so we never make more tiles than cores.
    if tile_b is None:
        n_tiles = _num_tensorcores()
        tile_b = max(8, _round_up(pl.cdiv(B, n_tiles), 8))
    tile_b = min(tile_b, _round_up(B, 8))

    # Cast input to the bf16 compute dtype on the host: halves input DMA and
    # removes the in-kernel VPU cast on the first layer.
    x = x.astype(w_in.dtype)

    # Pad batch only if tile_b does not divide it (never the case for the
    # auto-selected tiles above when B is a multiple of 8*num_cores).
    b_pad = _round_up(B, tile_b)
    if b_pad != B:
        x = jnp.pad(x, ((0, b_pad - B), (0, 0)))
    grid = (b_pad // tile_b,)

    in_specs = [
        pl.BlockSpec((tile_b, n_pixels), lambda i: (i, 0)),        # x (batch-tiled)
        pl.BlockSpec(w_in.shape, lambda i: (0, 0)),                # resident params
        pl.BlockSpec(w_mid.shape, lambda i: (0, 0, 0)),            # (constant index_map
        pl.BlockSpec(w_out.shape, lambda i: (0, 0)),               #  -> fetched once)
        pl.BlockSpec(b_hid.shape, lambda i: (0, 0)),
        pl.BlockSpec(b_out.shape, lambda i: (0, 0)),
    ]
    out_spec = pl.BlockSpec((tile_b, n_pixels), lambda i: (i, 0))

    # Advisory cost estimate so XLA schedules around this ~µs-scale call.
    flops = 2 * b_pad * (n_pixels * _HIDDEN
                         + w_mid.shape[0] * _HIDDEN * _HIDDEN
                         + _HIDDEN * n_pixels)
    param_bytes = sum(int(a.size) * a.dtype.itemsize
                      for a in (w_in, w_mid, w_out, b_hid, b_out))
    bytes_accessed = (int(x.size) * x.dtype.itemsize
                      + b_pad * n_pixels * jnp.dtype(out_dtype).itemsize
                      + param_bytes)
    cost = pl.CostEstimate(flops=flops, transcendentals=0,
                           bytes_accessed=bytes_accessed)

    out = pl.pallas_call(
        ae_kernel,
        out_shape=jax.ShapeDtypeStruct((b_pad, n_pixels), out_dtype),
        grid_spec=pltpu.PrefetchScalarGridSpec(
            num_scalar_prefetch=0,
            grid=grid,
            in_specs=in_specs,
            out_specs=out_spec,
        ),
        compiler_params=pltpu.CompilerParams(
            dimension_semantics=("parallel",),   # batch tiles shard across TCs (v7x)
        ),
        cost_estimate=cost,
    )(x, w_in, w_mid, w_out, b_hid, b_out)

    return out[:B] if b_pad != B else out


# ---------------------------------------------------------------------------
# Init + references
# ---------------------------------------------------------------------------
def init_params(n_pixels, key):
    """PyTorch-Linear-style init: U[-1/sqrt(fan_in), +1/sqrt(fan_in)]."""
    params = []
    for (d_in, d_out) in _layer_dims(n_pixels):
        key, kw, kb = jax.random.split(key, 3)
        bound = 1.0 / (d_in ** 0.5)
        w = jax.random.uniform(kw, (d_in, d_out), jnp.float32, -bound, bound)
        b = jax.random.uniform(kb, (1, d_out), jnp.float32, -bound, bound)
        params += [w, b]
    return params


def ae_reference_f32(x, params):
    """Pure-JAX f32 reference matching the PyTorch module exactly."""
    h = x
    for i in range(len(params) // 2):
        h = h @ params[2 * i] + params[2 * i + 1]
        if i in _RELU_AFTER:
            h = jnp.maximum(h, 0.0)
    return h


def ae_reference_packed(x, packed):
    """Pure-JAX reference with the same bf16-operand / f32-accum arithmetic as the kernel."""
    w_in, w_mid, w_out, b_hid, b_out = packed
    cdt = w_in.dtype
    h = jnp.dot(x.astype(cdt), w_in, preferred_element_type=jnp.float32)
    h = jnp.maximum(h + b_hid[0:1], 0.0).astype(cdt)
    for i in range(w_mid.shape[0]):
        h = jnp.dot(h, w_mid[i], preferred_element_type=jnp.float32)
        h = jnp.maximum(h + b_hid[i + 1:i + 2], 0.0).astype(cdt)
    h = jnp.dot(h, w_out, preferred_element_type=jnp.float32) + b_out
    return h.astype(jnp.float32)


# ---------------------------------------------------------------------------
if __name__ == "__main__":
    n_pixels = 128
    batch = 256

    key = jax.random.PRNGKey(0)
    key, kx = jax.random.split(key)
    x = jax.random.normal(kx, (batch, n_pixels), dtype=jnp.float32)
    params = init_params(n_pixels, key)
    packed = pack_params(params, n_pixels)

    fwd = jax.jit(ae_forward)   # tile_b auto-selected per TPU generation
    out = fwd(x, packed)
    jax.block_until_ready(out)

    assert out.shape == (batch, n_pixels)

    # Tight check against a reference using identical bf16/f32 arithmetic + packing.
    ref_packed = ae_reference_packed(x, packed)
    assert jnp.allclose(out, ref_packed, atol=2e-2, rtol=2e-2), "mismatch vs packed bf16 reference"

    # Loose check against the exact f32 PyTorch-equivalent math (bf16 MXU operands
    # introduce a small, bounded relative error).
    ref_f32 = ae_reference_f32(x, params)
    rel_err = jnp.max(jnp.abs(out - ref_f32)) / jnp.maximum(jnp.max(jnp.abs(ref_f32)), 1e-3)
    assert float(rel_err) < 0.05, f"relative error too large vs f32 reference: {float(rel_err)}"

    print("KERNEL_OK")
</pallas_src>

<mosaic_0001>
module attributes {stable_mosaic.version = 11 : i64} {
  func.func @ae_kernel(%arg0: i32, %arg1: memref<256x128xbf16, #tpu.memory_space<vmem>>, %arg2: memref<128x128xbf16, #tpu.memory_space<vmem>>, %arg3: memref<7x128x128xbf16, #tpu.memory_space<vmem>>, %arg4: memref<128x128xbf16, #tpu.memory_space<vmem>>, %arg5: memref<8x128xf32, #tpu.memory_space<vmem>>, %arg6: memref<1x128xf32, #tpu.memory_space<vmem>>, %arg7: memref<256x128xf32, #tpu.memory_space<vmem>>) attributes {dimension_semantics = [#tpu.dimension_semantics<parallel>], iteration_bounds = array<i64: 1>, scalar_prefetch = 0 : i64, scratch_operands = 0 : i64, tpu.core_type = #tpu.core_type<tc>, window_params = [{transform_indices = @transform_0, window_bounds = array<i64: 256, 128>}, {pipeline_mode = #tpu.pipeline_mode<synchronous>, transform_indices = @transform_1, window_bounds = array<i64: 128, 128>}, {pipeline_mode = #tpu.pipeline_mode<synchronous>, transform_indices = @transform_2, window_bounds = array<i64: 7, 128, 128>}, {pipeline_mode = #tpu.pipeline_mode<synchronous>, transform_indices = @transform_3, window_bounds = array<i64: 128, 128>}, {pipeline_mode = #tpu.pipeline_mode<synchronous>, transform_indices = @transform_4, window_bounds = array<i64: 8, 128>}, {pipeline_mode = #tpu.pipeline_mode<synchronous>, transform_indices = @transform_5, window_bounds = array<i64: 1, 128>}, {transform_indices = @transform_6, window_bounds = array<i64: 256, 128>}]} {
    %c0 = arith.constant 0 : index
    %c0_0 = arith.constant 0 : index
    %0 = vector.load %arg1[%c0, %c0_0] : memref<256x128xbf16, #tpu.memory_space<vmem>>, vector<256x128xbf16>
    %c0_1 = arith.constant 0 : index
    %c0_2 = arith.constant 0 : index
    %1 = vector.load %arg2[%c0_1, %c0_2] : memref<128x128xbf16, #tpu.memory_space<vmem>>, vector<128x128xbf16>
    %cst = arith.constant dense<0.000000e+00> : vector<256x128xf32>
    %2 = tpu.matmul %0, %1, %cst {dimension_numbers = #tpu.dot_dimension_numbers<[1], [0], [0], [1], [0, 0, 1, 1], [], []>} : vector<256x128xbf16>, vector<128x128xbf16>, vector<256x128xf32> -> vector<256x128xf32>
    %c0_3 = arith.constant 0 : index
    %c0_4 = arith.constant 0 : index
    %3 = vector.load %arg5[%c0_3, %c0_4] : memref<8x128xf32, #tpu.memory_space<vmem>>, vector<1x128xf32>
    %4 = vector.broadcast %3 : vector<1x128xf32> to vector<256x128xf32>
    %5 = arith.addf %2, %4 : vector<256x128xf32>
    %cst_5 = arith.constant 0.000000e+00 : f32
    %6 = vector.broadcast %cst_5 : f32 to vector<256x128xf32>
    %7 = arith.maximumf %5, %6 : vector<256x128xf32>
    %8 = arith.truncf %7 : vector<256x128xf32> to vector<256x128xbf16>
    %c0_6 = arith.constant 0 : index
    %c0_7 = arith.constant 0 : index
    %c0_8 = arith.constant 0 : index
    %9 = vector.load %arg3[%c0_6, %c0_7, %c0_8] : memref<7x128x128xbf16, #tpu.memory_space<vmem>>, vector<1x128x128xbf16>
    %10 = vector.shape_cast %9 : vector<1x128x128xbf16> to vector<128x128xbf16>
    %cst_9 = arith.constant dense<0.000000e+00> : vector<256x128xf32>
    %11 = tpu.matmul %8, %10, %cst_9 {dimension_numbers = #tpu.dot_dimension_numbers<[1], [0], [0], [1], [0, 0, 1, 1], [], []>} : vector<256x128xbf16>, vector<128x128xbf16>, vector<256x128xf32> -> vector<256x128xf32>
    %c1 = arith.constant 1 : index
    %c0_10 = arith.constant 0 : index
    %12 = vector.load %arg5[%c1, %c0_10] : memref<8x128xf32, #tpu.memory_space<vmem>>, vector<1x128xf32>
    %13 = vector.broadcast %12 : vector<1x128xf32> to vector<256x128xf32>
    %14 = arith.addf %11, %13 : vector<256x128xf32>
    %cst_11 = arith.constant 0.000000e+00 : f32
    %15 = vector.broadcast %cst_11 : f32 to vector<256x128xf32>
    %16 = arith.maximumf %14, %15 : vector<256x128xf32>
    %17 = arith.truncf %16 : vector<256x128xf32> to vector<256x128xbf16>
    %c1_12 = arith.constant 1 : index
    %c0_13 = arith.constant 0 : index
    %c0_14 = arith.constant 0 : index
    %18 = vector.load %arg3[%c1_12, %c0_13, %c0_14] : memref<7x128x128xbf16, #tpu.memory_space<vmem>>, vector<1x128x128xbf16>
    %19 = vector.shape_cast %18 : vector<1x128x128xbf16> to vector<128x128xbf16>
    %cst_15 = arith.constant dense<0.000000e+00> : vector<256x128xf32>
    %20 = tpu.matmul %17, %19, %cst_15 {dimension_numbers = #tpu.dot_dimension_numbers<[1], [0], [0], [1], [0, 0, 1, 1], [], []>} : vector<256x128xbf16>, vector<128x128xbf16>, vector<256x128xf32> -> vector<256x128xf32>
    %c2 = arith.constant 2 : index
    %c0_16 = arith.constant 0 : index
    %21 = vector.load %arg5[%c2, %c0_16] : memref<8x128xf32, #tpu.memory_space<vmem>>, vector<1x128xf32>
    %22 = vector.broadcast %21 : vector<1x128xf32> to vector<256x128xf32>
    %23 = arith.addf %20, %22 : vector<256x128xf32>
    %cst_17 = arith.constant 0.000000e+00 : f32
    %24 = vector.broadcast %cst_17 : f32 to vector<256x128xf32>
    %25 = arith.maximumf %23, %24 : vector<256x128xf32>
    %26 = arith.truncf %25 : vector<256x128xf32> to vector<256x128xbf16>
    %c2_18 = arith.constant 2 : index
    %c0_19 = arith.constant 0 : index
    %c0_20 = arith.constant 0 : index
    %27 = vector.load %arg3[%c2_18, %c0_19, %c0_20] : memref<7x128x128xbf16, #tpu.memory_space<vmem>>, vector<1x128x128xbf16>
    %28 = vector.shape_cast %27 : vector<1x128x128xbf16> to vector<128x128xbf16>
    %cst_21 = arith.constant dense<0.000000e+00> : vector<256x128xf32>
    %29 = tpu.matmul %26, %28, %cst_21 {dimension_numbers = #tpu.dot_dimension_numbers<[1], [0], [0], [1], [0, 0, 1, 1], [], []>} : vector<256x128xbf16>, vector<128x128xbf16>, vector<256x128xf32> -> vector<256x128xf32>
    %c3 = arith.constant 3 : index
    %c0_22 = arith.constant 0 : index
    %30 = vector.load %arg5[%c3, %c0_22] : memref<8x128xf32, #tpu.memory_space<vmem>>, vector<1x128xf32>
    %31 = vector.broadcast %30 : vector<1x128xf32> to vector<256x128xf32>
    %32 = arith.addf %29, %31 : vector<256x128xf32>
    %cst_23 = arith.constant 0.000000e+00 : f32
    %33 = vector.broadcast %cst_23 : f32 to vector<256x128xf32>
    %34 = arith.maximumf %32, %33 : vector<256x128xf32>
    %35 = arith.truncf %34 : vector<256x128xf32> to vector<256x128xbf16>
    %c3_24 = arith.constant 3 : index
    %c0_25 = arith.constant 0 : index
    %c0_26 = arith.constant 0 : index
    %36 = vector.load %arg3[%c3_24, %c0_25, %c0_26] : memref<7x128x128xbf16, #tpu.memory_space<vmem>>, vector<1x128x128xbf16>
    %37 = vector.shape_cast %36 : vector<1x128x128xbf16> to vector<128x128xbf16>
    %cst_27 = arith.constant dense<0.000000e+00> : vector<256x128xf32>
    %38 = tpu.matmul %35, %37, %cst_27 {dimension_numbers = #tpu.dot_dimension_numbers<[1], [0], [0], [1], [0, 0, 1, 1], [], []>} : vector<256x128xbf16>, vector<128x128xbf16>, vector<256x128xf32> -> vector<256x128xf32>
    %c4 = arith.constant 4 : index
    %c0_28 = arith.constant 0 : index
    %39 = vector.load %arg5[%c4, %c0_28] : memref<8x128xf32, #tpu.memory_space<vmem>>, vector<1x128xf32>
    %40 = vector.broadcast %39 : vector<1x128xf32> to vector<256x128xf32>
    %41 = arith.addf %38, %40 : vector<256x128xf32>
    %cst_29 = arith.constant 0.000000e+00 : f32
    %42 = vector.broadcast %cst_29 : f32 to vector<256x128xf32>
    %43 = arith.maximumf %41, %42 : vector<256x128xf32>
    %44 = arith.truncf %43 : vector<256x128xf32> to vector<256x128xbf16>
    %c4_30 = arith.constant 4 : index
    %c0_31 = arith.constant 0 : index
    %c0_32 = arith.constant 0 : index
    %45 = vector.load %arg3[%c4_30, %c0_31, %c0_32] : memref<7x128x128xbf16, #tpu.memory_space<vmem>>, vector<1x128x128xbf16>
    %46 = vector.shape_cast %45 : vector<1x128x128xbf16> to vector<128x128xbf16>
    %cst_33 = arith.constant dense<0.000000e+00> : vector<256x128xf32>
    %47 = tpu.matmul %44, %46, %cst_33 {dimension_numbers = #tpu.dot_dimension_numbers<[1], [0], [0], [1], [0, 0, 1, 1], [], []>} : vector<256x128xbf16>, vector<128x128xbf16>, vector<256x128xf32> -> vector<256x128xf32>
    %c5 = arith.constant 5 : index
    %c0_34 = arith.constant 0 : index
    %48 = vector.load %arg5[%c5, %c0_34] : memref<8x128xf32, #tpu.memory_space<vmem>>, vector<1x128xf32>
    %49 = vector.broadcast %48 : vector<1x128xf32> to vector<256x128xf32>
    %50 = arith.addf %47, %49 : vector<256x128xf32>
    %cst_35 = arith.constant 0.000000e+00 : f32
    %51 = vector.broadcast %cst_35 : f32 to vector<256x128xf32>
    %52 = arith.maximumf %50, %51 : vector<256x128xf32>
    %53 = arith.truncf %52 : vector<256x128xf32> to vector<256x128xbf16>
    %c5_36 = arith.constant 5 : index
    %c0_37 = arith.constant 0 : index
    %c0_38 = arith.constant 0 : index
    %54 = vector.load %arg3[%c5_36, %c0_37, %c0_38] : memref<7x128x128xbf16, #tpu.memory_space<vmem>>, vector<1x128x128xbf16>
    %55 = vector.shape_cast %54 : vector<1x128x128xbf16> to vector<128x128xbf16>
    %cst_39 = arith.constant dense<0.000000e+00> : vector<256x128xf32>
    %56 = tpu.matmul %53, %55, %cst_39 {dimension_numbers = #tpu.dot_dimension_numbers<[1], [0], [0], [1], [0, 0, 1, 1], [], []>} : vector<256x128xbf16>, vector<128x128xbf16>, vector<256x128xf32> -> vector<256x128xf32>
    %c6 = arith.constant 6 : index
    %c0_40 = arith.constant 0 : index
    %57 = vector.load %arg5[%c6, %c0_40] : memref<8x128xf32, #tpu.memory_space<vmem>>, vector<1x128xf32>
    %58 = vector.broadcast %57 : vector<1x128xf32> to vector<256x128xf32>
    %59 = arith.addf %56, %58 : vector<256x128xf32>
    %cst_41 = arith.constant 0.000000e+00 : f32
    %60 = vector.broadcast %cst_41 : f32 to vector<256x128xf32>
    %61 = arith.maximumf %59, %60 : vector<256x128xf32>
    %62 = arith.truncf %61 : vector<256x128xf32> to vector<256x128xbf16>
    %c6_42 = arith.constant 6 : index
    %c0_43 = arith.constant 0 : index
    %c0_44 = arith.constant 0 : index
    %63 = vector.load %arg3[%c6_42, %c0_43, %c0_44] : memref<7x128x128xbf16, #tpu.memory_space<vmem>>, vector<1x128x128xbf16>
    %64 = vector.shape_cast %63 : vector<1x128x128xbf16> to vector<128x128xbf16>
    %cst_45 = arith.constant dense<0.000000e+00> : vector<256x128xf32>
    %65 = tpu.matmul %62, %64, %cst_45 {dimension_numbers = #tpu.dot_dimension_numbers<[1], [0], [0], [1], [0, 0, 1, 1], [], []>} : vector<256x128xbf16>, vector<128x128xbf16>, vector<256x128xf32> -> vector<256x128xf32>
    %c7 = arith.constant 7 : index
    %c0_46 = arith.constant 0 : index
    %66 = vector.load %arg5[%c7, %c0_46] : memref<8x128xf32, #tpu.memory_space<vmem>>, vector<1x128xf32>
    %67 = vector.broadcast %66 : vector<1x128xf32> to vector<256x128xf32>
    %68 = arith.addf %65, %67 : vector<256x128xf32>
    %cst_47 = arith.constant 0.000000e+00 : f32
    %69 = vector.broadcast %cst_47 : f32 to vector<256x128xf32>
    %70 = arith.maximumf %68, %69 : vector<256x128xf32>
    %71 = arith.truncf %70 : vector<256x128xf32> to vector<256x128xbf16>
    %c0_48 = arith.constant 0 : index
    %c0_49 = arith.constant 0 : index
    %72 = vector.load %arg4[%c0_48, %c0_49] : memref<128x128xbf16, #tpu.memory_space<vmem>>, vector<128x128xbf16>
    %cst_50 = arith.constant dense<0.000000e+00> : vector<256x128xf32>
    %73 = tpu.matmul %71, %72, %cst_50 {dimension_numbers = #tpu.dot_dimension_numbers<[1], [0], [0], [1], [0, 0, 1, 1], [], []>} : vector<256x128xbf16>, vector<128x128xbf16>, vector<256x128xf32> -> vector<256x128xf32>
    %c0_51 = arith.constant 0 : index
    %c0_52 = arith.constant 0 : index
    %74 = vector.load %arg6[%c0_51, %c0_52] : memref<1x128xf32, #tpu.memory_space<vmem>>, vector<1x128xf32>
    %75 = vector.broadcast %74 : vector<1x128xf32> to vector<256x128xf32>
    %76 = arith.addf %73, %75 : vector<256x128xf32>
    %c0_53 = arith.constant 0 : index
    %c0_54 = arith.constant 0 : index
    %77 = vector.load %arg7[%c0_53, %c0_54] : memref<256x128xf32, #tpu.memory_space<vmem>>, vector<256x128xf32>
    tpu.vector_store %arg7[%c0_53, %c0_54], %76 {strides = array<i32>} : memref<256x128xf32, #tpu.memory_space<vmem>>, vector<256x128xf32>,
    return
  }
  func.func @transform_0(%arg0: i32) -> (i32, i32) {
    %c0_i32 = arith.constant 0 : i32
    %c0_i32_0 = arith.constant 0 : i32
    return %arg0, %c0_i32 : i32, i32
  }
  func.func @transform_1(%arg0: i32) -> (i32, i32) {
    %c0_i32 = arith.constant 0 : i32
    %c0_i32_0 = arith.constant 0 : i32
    %c0_i32_1 = arith.constant 0 : i32
    return %c0_i32, %c0_i32_0 : i32, i32
  }
  func.func @transform_2(%arg0: i32) -> (i32, i32, i32) {
    %c0_i32 = arith.constant 0 : i32
    %c0_i32_0 = arith.constant 0 : i32
    %c0_i32_1 = arith.constant 0 : i32
    %c0_i32_2 = arith.constant 0 : i32
    return %c0_i32, %c0_i32_0, %c0_i32_1 : i32, i32, i32
  }
  func.func @transform_3(%arg0: i32) -> (i32, i32) {
    %c0_i32 = arith.constant 0 : i32
    %c0_i32_0 = arith.constant 0 : i32
    %c0_i32_1 = arith.constant 0 : i32
    return %c0_i32, %c0_i32_0 : i32, i32
  }
  func.func @transform_4(%arg0: i32) -> (i32, i32) {
    %c0_i32 = arith.constant 0 : i32
    %c0_i32_0 = arith.constant 0 : i32
    %c0_i32_1 = arith.constant 0 : i32
    return %c0_i32, %c0_i32_0 : i32, i32
  }
  func.func @transform_5(%arg0: i32) -> (i32, i32) {
    %c0_i32 = arith.constant 0 : i32
    %c0_i32_0 = arith.constant 0 : i32
    %c0_i32_1 = arith.constant 0 : i32
    return %c0_i32, %c0_i32_0 : i32, i32
  }
  func.func @transform_6(%arg0: i32) -> (i32, i32) {
    %c0_i32 = arith.constant 0 : i32
    %c0_i32_0 = arith.constant 0 : i32
    return %arg0, %c0_i32 : i32, i32
  }
}

</mosaic_0001>

<llo_original>
// kernel: ae_forward.1
$region0: #{ae_forward.1}
  #allocation0 [shape = 'u32[]', space=smem, size = 0x4, offset = 0x4, fixed_abs, tag = 'smem constant byte address 0x4 - core index']
  #allocation1 [shape = 'u32[144,128]{1,0:T(1,128)}', space=vmem, size = 0x12000, scoped, tag = 'internal scratch']
  %s0 = inlined_call_operand.vmem [shape: bf16[256,128], index: 0, kind: input, shape index: {}]
  %s1 = inlined_call_operand.vmem [shape: bf16[128,128], index: 1, kind: input, shape index: {}]
  %s2 = inlined_call_operand.hbm [shape: bf16[7,128,128], index: 2, kind: input, shape index: {}]
  %s3 = inlined_call_operand.vmem [shape: bf16[128,128], index: 3, kind: input, shape index: {}]
  %s4 = inlined_call_operand.vmem [shape: f32[8,128], index: 4, kind: input, shape index: {}]
  %s5 = inlined_call_operand.vmem [shape: f32[1,128], index: 5, kind: input, shape index: {}]
  %s6 = inlined_call_operand.hbm [shape: f32[256,128], index: 6, kind: output, shape index: {}]
  %s7 = sld [smem:[#allocation0]]
  $region38: #{ae_forward.1} parent=0
    _
  %s9 = ssub.s32 1, %s7
  %s10 = scalar_select 0, %s9, %s7
  $region1: #{ae_forward.1} parent=0
    #allocation2 [shape = 'u8[229376]{0}', space=vmem, size = 0x38000, scoped, tag = 'input window, operand 2, single buffered']
    #allocation3 [shape = 's32[1]{0}', space=sflag, size = 0x4, scoped, tag = 'scoped memory for ae_forward.1']
    #allocation4 [shape = 's32[1]{0}', space=sflag, size = 0x4, scoped, tag = 'scoped memory for ae_forward.1']
    #allocation5 [shape = 'u8[131072]{0}', space=vmem, size = 0x20000, scoped, tag = 'output window, operand 0, single buffered']
    %11 = vsyncpa [#allocation3], 0
    %12 = vsyncpa [#allocation4], 0
    // Predicated region
    $region2: #{ae_forward.1} parent=1 // pred_check
      _
    $region3: #{ae_forward.1} parent=1 // pred_check_branch
      %14 = sbr.rel (0) target = $region5
    $region4: #{ae_forward.1} parent=1 // pred_region
      _
    $region5: #{ae_forward.1} parent=1 // pred_fallthru
      _
    // Predicated region
    $region6: #{ae_forward.1} parent=1 // pred_check
      _
    $region7: #{ae_forward.1} parent=1 // pred_check_branch
      %16 = sbr.rel (0) target = $region9
    $region8: #{ae_forward.1} parent=1 // pred_region
      _
    $region9: #{ae_forward.1} parent=1 // pred_fallthru
      _
    // Predicated region
    $region10: #{ae_forward.1} parent=1 // pred_check
      _
    $region11: #{ae_forward.1} parent=1 // pred_check_branch
      %18 = sbr.rel (0) target = $region13
    $region12: #{ae_forward.1} parent=1 // pred_region
      %s20 = ssub.s32 7168, 7168
      %21 = vsyncadd [#allocation3], %s20
      %s22 = sshll.u32 [#allocation2], 4
      %s23 = int_to_ptr.vmem [resolvable:$true] %s22
      %28 = dma.hbm_to_vmem [thread:$0]  %s2, 7168, %s23, [#allocation3], 64, 64, 4
    $region13: #{ae_forward.1} parent=1 // pred_fallthru
      _
    // Predicated region
    $region14: #{ae_forward.1} parent=1 // pred_check
      _
    $region15: #{ae_forward.1} parent=1 // pred_check_branch
      %30 = sbr.rel (0) target = $region17
    $region16: #{ae_forward.1} parent=1 // pred_region
      _
    $region17: #{ae_forward.1} parent=1 // pred_fallthru
      _
    // Predicated region
    $region18: #{ae_forward.1} parent=1 // pred_check
      _
    $region19: #{ae_forward.1} parent=1 // pred_check_branch
      %32 = sbr.rel (0) target = $region21
    $region20: #{ae_forward.1} parent=1 // pred_region
      _
    $region21: #{ae_forward.1} parent=1 // pred_fallthru
      _
    // Predicated region
    $region22: #{ae_forward.1} parent=1 // pred_check
      _
    $region23: #{ae_forward.1} parent=1 // pred_check_branch
      %34 = sbr.rel (0) target = $region25
    $region24: #{ae_forward.1} parent=1 // pred_region
      _
    $region25: #{ae_forward.1} parent=1 // pred_fallthru
      _
    // Predicated region
    $region26: #{ae_forward.1} parent=1 // pred_check
      _
    $region27: #{ae_forward.1} parent=1 // pred_check_branch
      %36 = sbr.rel (0) target = $region29
    $region28: #{ae_forward.1} parent=1 // pred_region
      %37 = dma.done [#allocation3], 7168
    $region29: #{ae_forward.1} parent=1 // pred_fallthru
      _
    %v39 = vld [vmem:[%s0] sm:$0xf]
    %v40 = vld [vmem:[%s0 + $0x4] sm:$0xf]
    %v41 = vld [vmem:[%s0 + $0x8] sm:$0xf]
    %v42 = vld [vmem:[%s0 + $0xc] sm:$0xf]
    %v43 = vld [vmem:[%s0 + $0x10] sm:$0xf]
    %v44 = vld [vmem:[%s0 + $0x14] sm:$0xf]
    %v45 = vld [vmem:[%s0 + $0x18] sm:$0xf]
    %v46 = vld [vmem:[%s0 + $0x1c] sm:$0xf]
    %v47 = vld [vmem:[%s0 + $0x20] sm:$0xf]
    %v48 = vld [vmem:[%s0 + $0x24] sm:$0xf]
    %v49 = vld [vmem:[%s0 + $0x28] sm:$0xf]
    %v50 = vld [vmem:[%s0 + $0x2c] sm:$0xf]
    %v51 = vld [vmem:[%s0 + $0x30] sm:$0xf]
    %v52 = vld [vmem:[%s0 + $0x34] sm:$0xf]
    %v53 = vld [vmem:[%s0 + $0x38] sm:$0xf]
    %v54 = vld [vmem:[%s0 + $0x3c] sm:$0xf]
    %v55 = vld [vmem:[%s0 + $0x40] sm:$0xf]
    %v56 = vld [vmem:[%s0 + $0x44] sm:$0xf]
    %v57 = vld [vmem:[%s0 + $0x48] sm:$0xf]
    %v58 = vld [vmem:[%s0 + $0x4c] sm:$0xf]
    %v59 = vld [vmem:[%s0 + $0x50] sm:$0xf]
    %v60 = vld [vmem:[%s0 + $0x54] sm:$0xf]
    %v61 = vld [vmem:[%s0 + $0x58] sm:$0xf]
    %v62 = vld [vmem:[%s0 + $0x5c] sm:$0xf]
    %v63 = vld [vmem:[%s0 + $0x60] sm:$0xf]
    %v64 = vld [vmem:[%s0 + $0x64] sm:$0xf]
    %v65 = vld [vmem:[%s0 + $0x68] sm:$0xf]
    %v66 = vld [vmem:[%s0 + $0x6c] sm:$0xf]
    %v67 = vld [vmem:[%s0 + $0x70] sm:$0xf]
    %v68 = vld [vmem:[%s0 + $0x74] sm:$0xf]
    %v69 = vld [vmem:[%s0 + $0x78] sm:$0xf]
    %v70 = vld [vmem:[%s0 + $0x7c] sm:$0xf]
    %v71 = vld [vmem:[%s1] sm:$0xf]
    %v72 = vld [vmem:[%s1 + $0x4] sm:$0xf]
    %v73 = vld [vmem:[%s1 + $0x8] sm:$0xf]
    %v74 = vld [vmem:[%s1 + $0xc] sm:$0xf]
    %v75 = vld [vmem:[%s1 + $0x10] sm:$0xf]
    %v76 = vld [vmem:[%s1 + $0x14] sm:$0xf]
    %v77 = vld [vmem:[%s1 + $0x18] sm:$0xf]
    %v78 = vld [vmem:[%s1 + $0x1c] sm:$0xf]
    %v79 = vld [vmem:[%s1 + $0x20] sm:$0xf]
    %v80 = vld [vmem:[%s1 + $0x24] sm:$0xf]
    %v81 = vld [vmem:[%s1 + $0x28] sm:$0xf]
    %v82 = vld [vmem:[%s1 + $0x2c] sm:$0xf]
    %v83 = vld [vmem:[%s1 + $0x30] sm:$0xf]
    %v84 = vld [vmem:[%s1 + $0x34] sm:$0xf]
    %v85 = vld [vmem:[%s1 + $0x38] sm:$0xf]
    %v86 = vld [vmem:[%s1 + $0x3c] sm:$0xf]
    %v87 = vld [vmem:[%s4] sm:$0x1]
    %v88 = vlaneseq
    %v89 = vshrl.u32 %v88, 7
    %v90 = vsub.s32 0, %v89
    %v91 = vrot.slane %v87, %v90
    %v124 = vunpack.c.l.b16 %v39
    %v125 = vunpack.c.l.b16 %v40
    %v126 = vunpack.c.l.b16 %v41
    %v127 = vunpack.c.l.b16 %v42
    %v128 = vunpack.c.l.b16 %v43
    %v129 = vunpack.c.l.b16 %v44
    %v130 = vunpack.c.l.b16 %v45
    %v131 = vunpack.c.l.b16 %v46
    %v132 = vunpack.c.l.b16 %v47
    %v133 = vunpack.c.l.b16 %v48
    %v134 = vunpack.c.l.b16 %v49
    %v135 = vunpack.c.l.b16 %v50
    %v136 = vunpack.c.l.b16 %v51
    %v137 = vunpack.c.l.b16 %v52
    %v138 = vunpack.c.l.b16 %v53
    %v139 = vunpack.c.l.b16 %v54
    %v140 = vunpack.c.l.b16 %v55
    %v141 = vunpack.c.l.b16 %v56
    %v142 = vunpack.c.l.b16 %v57
    %v143 = vunpack.c.l.b16 %v58
    %v144 = vunpack.c.l.b16 %v59
    %v145 = vunpack.c.l.b16 %v60
    %v146 = vunpack.c.l.b16 %v61
    %v147 = vunpack.c.l.b16 %v62
    %v148 = vunpack.c.l.b16 %v63
    %v149 = vunpack.c.l.b16 %v64
    %v150 = vunpack.c.l.b16 %v65
    %v151 = vunpack.c.l.b16 %v66
    %v152 = vunpack.c.l.b16 %v67
    %v153 = vunpack.c.l.b16 %v68
    %v154 = vunpack.c.l.b16 %v69
    %v155 = vunpack.c.l.b16 %v70
    %v156 = vpack.c.b16 %v125, %v124
    %v157 = vpack.c.b16 %v127, %v126
    %v158 = vpack.c.b16 %v129, %v128
    %v159 = vpack.c.b16 %v131, %v130
    %v160 = vpack.c.b16 %v133, %v132
    %v161 = vpack.c.b16 %v135, %v134
    %v162 = vpack.c.b16 %v137, %v136
    %v163 = vpack.c.b16 %v139, %v138
    %v164 = vpack.c.b16 %v141, %v140
    %v165 = vpack.c.b16 %v143, %v142
    %v166 = vpack.c.b16 %v145, %v144
    %v167 = vpack.c.b16 %v147, %v146
    %v168 = vpack.c.b16 %v149, %v148
    %v169 = vpack.c.b16 %v151, %v150
    %v170 = vpack.c.b16 %v153, %v152
    %v171 = vpack.c.b16 %v155, %v154
    %v204 = vunpack.c.l.b16 %v71
    %v205 = vunpack.c.l.b16 %v72
    %v206 = vunpack.c.l.b16 %v73
    %v207 = vunpack.c.l.b16 %v74
    %v208 = vunpack.c.l.b16 %v75
    %v209 = vunpack.c.l.b16 %v76
    %v210 = vunpack.c.l.b16 %v77
    %v211 = vunpack.c.l.b16 %v78
    %v212 = vunpack.c.l.b16 %v79
    %v213 = vunpack.c.l.b16 %v80
    %v214 = vunpack.c.l.b16 %v81
    %v215 = vunpack.c.l.b16 %v82
    %v216 = vunpack.c.l.b16 %v83
    %v217 = vunpack.c.l.b16 %v84
    %v218 = vunpack.c.l.b16 %v85
    %v219 = vunpack.c.l.b16 %v86
    %v220 = vpack.c.b16 %v205, %v204
    %v221 = vpack.c.b16 %v207, %v206
    %v222 = vpack.c.b16 %v209, %v208
    %v223 = vpack.c.b16 %v211, %v210
    %v224 = vpack.c.b16 %v213, %v212
    %v225 = vpack.c.b16 %v215, %v214
    %v226 = vpack.c.b16 %v217, %v216
    %v227 = vpack.c.b16 %v219, %v218
    %236 = vmatprep.subr.bf16.mxu0 0
    %237 = vmatpush1.bf16.msra.mxu0 %v220
    %238 = vmatprep.subr.bf16.mxu0 0
    %239 = vmatpush1.bf16.msra.mxu0 %v221
    %240 = vmatprep.subr.bf16.mxu0 0
    %241 = vmatpush1.bf16.msra.mxu0 %v222
    %242 = vmatprep.subr.bf16.mxu0 0
    %243 = vmatpush1.bf16.msra.mxu0 %v223
    %244 = vmatprep.subr.bf16.mxu0 0
    %245 = vmatpush1.bf16.msra.mxu0 %v224
    %246 = vmatprep.subr.bf16.mxu0 0
    %247 = vmatpush1.bf16.msra.mxu0 %v225
    %248 = vmatprep.subr.bf16.mxu0 0
    %249 = vmatpush1.bf16.msra.mxu0 %v226
    %250 = vmatprep.subr.bf16.mxu0 0
    %251 = vmatpush1.bf16.msra.mxu0 %v227
    %252 = vmatprep.subr.bf16.mxu0 0
    %253 = vmatpush1.bf16.msra.mxu0 0
    %254 = vmatprep.subr.bf16.mxu0 0
    %255 = vmatpush1.bf16.msra.mxu0 0
    %256 = vmatprep.subr.bf16.mxu0 0
    %257 = vmatpush1.bf16.msra.mxu0 0
    %258 = vmatprep.subr.bf16.mxu0 0
    %259 = vmatpush1.bf16.msra.mxu0 0
    %260 = vmatprep.subr.bf16.mxu0 0
    %261 = vmatpush1.bf16.msra.mxu0 0
    %262 = vmatprep.subr.bf16.mxu0 0
    %263 = vmatpush1.bf16.msra.mxu0 0
    %264 = vmatprep.subr.bf16.mxu0 0
    %265 = vmatpush1.bf16.msra.mxu0 0
    %266 = vmatprep.subr.bf16.mxu0 0
    %267 = vmatpush1.bf16.msra.mxu0 0
    %268 = vmatprep.mubr.bf16.mxu0 0
    %269 = vmatmul.mubr.bf16.gmra.mrb[0].mxu0 %v156
    %v270 = vpop.f32.mrb[0].mxu0
    %v271 = vadd.f32 %v91, %v270
    %v272 = vpop.f32.mrb[0].mxu0
    %v273 = vpop.f32.mrb[0].mxu0
    %v274 = vadd.f32 %v91, %v273
    %v275 = vpop.f32.mrb[0].mxu0
    %276 = vmatprep.mubr.bf16.mxu0 0
    %277 = vmatmul.mubr.bf16.gmra.mrb[0].mxu0 %v157
    %v278 = vpop.f32.mrb[0].mxu0
    %v279 = vadd.f32 %v91, %v278
    %v280 = vpop.f32.mrb[0].mxu0
    %v281 = vpop.f32.mrb[0].mxu0
    %v282 = vadd.f32 %v91, %v281
    %v283 = vpop.f32.mrb[0].mxu0
    %284 = vmatprep.mubr.bf16.mxu0 0
    %285 = vmatmul.mubr.bf16.gmra.mrb[0].mxu0 %v158
    %v286 = vpop.f32.mrb[0].mxu0
    %v287 = vadd.f32 %v91, %v286
    %v288 = vpop.f32.mrb[0].mxu0
    %v289 = vpop.f32.mrb[0].mxu0
    %v290 = vadd.f32 %v91, %v289
    %v291 = vpop.f32.mrb[0].mxu0
    %292 = vmatprep.mubr.bf16.mxu0 0
    %293 = vmatmul.mubr.bf16.gmra.mrb[0].mxu0 %v159
    %v294 = vpop.f32.mrb[0].mxu0
    %v295 = vadd.f32 %v91, %v294
    %v296 = vpop.f32.mrb[0].mxu0
    %v297 = vpop.f32.mrb[0].mxu0
    %v298 = vadd.f32 %v91, %v297
    %v299 = vpop.f32.mrb[0].mxu0
    %300 = vmatprep.mubr.bf16.mxu0 0
    %301 = vmatmul.mubr.bf16.gmra.mrb[0].mxu0 %v160
    %v302 = vpop.f32.mrb[0].mxu0
    %v303 = vadd.f32 %v91, %v302
    %v304 = vpop.f32.mrb[0].mxu0
    %v305 = vpop.f32.mrb[0].mxu0
    %v306 = vadd.f32 %v91, %v305
    %v307 = vpop.f32.mrb[0].mxu0
    %308 = vmatprep.mubr.bf16.mxu0 0
    %309 = vmatmul.mubr.bf16.gmra.mrb[0].mxu0 %v161
    %v310 = vpop.f32.mrb[0].mxu0
    %v311 = vadd.f32 %v91, %v310
    %v312 = vpop.f32.mrb[0].mxu0
    %v313 = vpop.f32.mrb[0].mxu0
    %v314 = vadd.f32 %v91, %v313
    %v315 = vpop.f32.mrb[0].mxu0
    %316 = vmatprep.mubr.bf16.mxu0 0
    %317 = vmatmul.mubr.bf16.gmra.mrb[0].mxu0 %v162
    %v318 = vpop.f32.mrb[0].mxu0
    %v319 = vadd.f32 %v91, %v318
    %v320 = vpop.f32.mrb[0].mxu0
    %v321 = vpop.f32.mrb[0].mxu0
    %v322 = vadd.f32 %v91, %v321
    %v323 = vpop.f32.mrb[0].mxu0
    %324 = vmatprep.mubr.bf16.mxu0 0
    %325 = vmatmul.mubr.bf16.gmra.mrb[0].mxu0 %v163
    %v326 = vpop.f32.mrb[0].mxu0
    %v327 = vadd.f32 %v91, %v326
    %v328 = vpop.f32.mrb[0].mxu0
    %v329 = vpop.f32.mrb[0].mxu0
    %v330 = vadd.f32 %v91, %v329
    %v331 = vpop.f32.mrb[0].mxu0
    %332 = vmatprep.mubr.bf16.mxu0 0
    %333 = vmatmul.mubr.bf16.gmra.mrb[0].mxu0 %v164
    %v334 = vpop.f32.mrb[0].mxu0
    %v335 = vadd.f32 %v91, %v334
    %v336 = vpop.f32.mrb[0].mxu0
    %v337 = vpop.f32.mrb[0].mxu0
    %v338 = vadd.f32 %v91, %v337
    %v339 = vpop.f32.mrb[0].mxu0
    %340 = vmatprep.mubr.bf16.mxu0 0
    %341 = vmatmul.mubr.bf16.gmra.mrb[0].mxu0 %v165
    %v342 = vpop.f32.mrb[0].mxu0
    %v343 = vadd.f32 %v91, %v342
    %v344 = vpop.f32.mrb[0].mxu0
    %v345 = vpop.f32.mrb[0].mxu0
    %v346 = vadd.f32 %v91, %v345
    %v347 = vpop.f32.mrb[0].mxu0
    %348 = vmatprep.mubr.bf16.mxu0 0
    %349 = vmatmul.mubr.bf16.gmra.mrb[0].mxu0 %v166
    %v350 = vpop.f32.mrb[0].mxu0
    %v351 = vadd.f32 %v91, %v350
    %v352 = vpop.f32.mrb[0].mxu0
    %v353 = vpop.f32.mrb[0].mxu0
    %v354 = vadd.f32 %v91, %v353
    %v355 = vpop.f32.mrb[0].mxu0
    %356 = vmatprep.mubr.bf16.mxu0 0
    %357 = vmatmul.mubr.bf16.gmra.mrb[0].mxu0 %v167
    %v358 = vpop.f32.mrb[0].mxu0
    %v359 = vadd.f32 %v91, %v358
    %v360 = vpop.f32.mrb[0].mxu0
    %v361 = vpop.f32.mrb[0].mxu0
    %v362 = vadd.f32 %v91, %v361
    %v363 = vpop.f32.mrb[0].mxu0
    %364 = vmatprep.mubr.bf16.mxu0 0
    %365 = vmatmul.mubr.bf16.gmra.mrb[0].mxu0 %v168
    %v366 = vpop.f32.mrb[0].mxu0
    %v367 = vadd.f32 %v91, %v366
    %v368 = vpop.f32.mrb[0].mxu0
    %v369 = vpop.f32.mrb[0].mxu0
    %v370 = vadd.f32 %v91, %v369
    %v371 = vpop.f32.mrb[0].mxu0
    %372 = vmatprep.mubr.bf16.mxu0 0
    %373 = vmatmul.mubr.bf16.gmra.mrb[0].mxu0 %v169
    %v374 = vpop.f32.mrb[0].mxu0
    %v375 = vadd.f32 %v91, %v374
    %v376 = vpop.f32.mrb[0].mxu0
    %v377 = vpop.f32.mrb[0].mxu0
    %v378 = vadd.f32 %v91, %v377
    %v379 = vpop.f32.mrb[0].mxu0
    %380 = vmatprep.mubr.bf16.mxu0 0
    %381 = vmatmul.mubr.bf16.gmra.mrb[0].mxu0 %v170
    %v382 = vpop.f32.mrb[0].mxu0
    %v383 = vadd.f32 %v91, %v382
    %v384 = vpop.f32.mrb[0].mxu0
    %v385 = vpop.f32.mrb[0].mxu0
    %v386 = vadd.f32 %v91, %v385
    %v387 = vpop.f32.mrb[0].mxu0
    %388 = vmatprep.mubr.bf16.mxu0 0
    %389 = vmatmul.mubr.bf16.gmra.mrb[0].mxu0 %v171
    %v390 = vpop.f32.mrb[0].mxu0
    %v391 = vadd.f32 %v91, %v390
    %v392 = vpop.f32.mrb[0].mxu0
    %v393 = vpop.f32.mrb[0].mxu0
    %v394 = vadd.f32 %v91, %v393
    %v395 = vpop.f32.mrb[0].mxu0
    %396 = vdwg.mxu0
    %v397 = vmax.f32 %v271, 0.0
    %v398 = vmax.f32 %v274, 0.0
    %v399 = vmax.f32 %v279, 0.0
    %v400 = vmax.f32 %v282, 0.0
    %v401 = vmax.f32 %v287, 0.0
    %v402 = vmax.f32 %v290, 0.0
    %v403 = vmax.f32 %v295, 0.0
    %v404 = vmax.f32 %v298, 0.0
    %v405 = vmax.f32 %v303, 0.0
    %v406 = vmax.f32 %v306, 0.0
    %v407 = vmax.f32 %v311, 0.0
    %v408 = vmax.f32 %v314, 0.0
    %v409 = vmax.f32 %v319, 0.0
    %v410 = vmax.f32 %v322, 0.0
    %v411 = vmax.f32 %v327, 0.0
    %v412 = vmax.f32 %v330, 0.0
    %v413 = vmax.f32 %v335, 0.0
    %v414 = vmax.f32 %v338, 0.0
    %v415 = vmax.f32 %v343, 0.0
    %v416 = vmax.f32 %v346, 0.0
    %v417 = vmax.f32 %v351, 0.0
    %v418 = vmax.f32 %v354, 0.0
    %v419 = vmax.f32 %v359, 0.0
    %v420 = vmax.f32 %v362, 0.0
    %v421 = vmax.f32 %v367, 0.0
    %v422 = vmax.f32 %v370, 0.0
    %v423 = vmax.f32 %v375, 0.0
    %v424 = vmax.f32 %v378, 0.0
    %v425 = vmax.f32 %v383, 0.0
    %v426 = vmax.f32 %v386, 0.0
    %v427 = vmax.f32 %v391, 0.0
    %v428 = vmax.f32 %v394, 0.0
    %v429 = vpack.c.bf16 %v398, %v397
    %v430 = vpack.c.bf16 %v400, %v399
    %v431 = vpack.c.bf16 %v402, %v401
    %v432 = vpack.c.bf16 %v404, %v403
    %v433 = vpack.c.bf16 %v406, %v405
    %v434 = vpack.c.bf16 %v408, %v407
    %v435 = vpack.c.bf16 %v410, %v409
    %v436 = vpack.c.bf16 %v412, %v411
    %v437 = vpack.c.bf16 %v414, %v413
    %v438 = vpack.c.bf16 %v416, %v415
    %v439 = vpack.c.bf16 %v418, %v417
    %v440 = vpack.c.bf16 %v420, %v419
    %v441 = vpack.c.bf16 %v422, %v421
    %v442 = vpack.c.bf16 %v424, %v423
    %v443 = vpack.c.bf16 %v426, %v425
    %v444 = vpack.c.bf16 %v428, %v427
    %v445 = vld [vmem:[#allocation2] sm:$0xf]
    %v446 = vld [vmem:[#allocation2 + $0x4] sm:$0xf]
    %v447 = vld [vmem:[#allocation2 + $0x8] sm:$0xf]
    %v448 = vld [vmem:[#allocation2 + $0xc] sm:$0xf]
    %v449 = vld [vmem:[#allocation2 + $0x10] sm:$0xf]
    %v450 = vld [vmem:[#allocation2 + $0x14] sm:$0xf]
    %v451 = vld [vmem:[#allocation2 + $0x18] sm:$0xf]
    %v452 = vld [vmem:[#allocation2 + $0x1c] sm:$0xf]
    %v453 = vld [vmem:[#allocation2 + $0x20] sm:$0xf]
    %v454 = vld [vmem:[#allocation2 + $0x24] sm:$0xf]
    %v455 = vld [vmem:[#allocation2 + $0x28] sm:$0xf]
    %v456 = vld [vmem:[#allocation2 + $0x2c] sm:$0xf]
    %v457 = vld [vmem:[#allocation2 + $0x30] sm:$0xf]
    %v458 = vld [vmem:[#allocation2 + $0x34] sm:$0xf]
    %v459 = vld [vmem:[#allocation2 + $0x38] sm:$0xf]
    %v460 = vld [vmem:[#allocation2 + $0x3c] sm:$0xf]
    %v461 = vld [vmem:[%s4 + $0x1] sm:$0x1]
    %v462 = vlaneseq
    %v463 = vshrl.u32 %v462, 7
    %v464 = vsub.s32 0, %v463
    %v465 = vrot.slane %v461, %v464
    %v482 = vunpack.c.l.b16 %v445
    %v483 = vunpack.c.l.b16 %v446
    %v484 = vunpack.c.l.b16 %v447
    %v485 = vunpack.c.l.b16 %v448
    %v486 = vunpack.c.l.b16 %v449
    %v487 = vunpack.c.l.b16 %v450
    %v488 = vunpack.c.l.b16 %v451
    %v489 = vunpack.c.l.b16 %v452
    %v490 = vunpack.c.l.b16 %v453
    %v491 = vunpack.c.l.b16 %v454
    %v492 = vunpack.c.l.b16 %v455
    %v493 = vunpack.c.l.b16 %v456
    %v494 = vunpack.c.l.b16 %v457
    %v495 = vunpack.c.l.b16 %v458
    %v496 = vunpack.c.l.b16 %v459
    %v497 = vunpack.c.l.b16 %v460
    %v498 = vpack.c.b16 %v483, %v482
    %v499 = vpack.c.b16 %v485, %v484
    %v500 = vpack.c.b16 %v487, %v486
    %v501 = vpack.c.b16 %v489, %v488
    %v502 = vpack.c.b16 %v491, %v490
    %v503 = vpack.c.b16 %v493, %v492
    %v504 = vpack.c.b16 %v495, %v494
    %v505 = vpack.c.b16 %v497, %v496
    %514 = vmatprep.subr.bf16.mxu0 0
    %515 = vmatpush1.bf16.msra.mxu0 %v498
    %516 = vmatprep.subr.bf16.mxu0 0
    %517 = vmatpush1.bf16.msra.mxu0 %v499
    %518 = vmatprep.subr.bf16.mxu0 0
    %519 = vmatpush1.bf16.msra.mxu0 %v500
    %520 = vmatprep.subr.bf16.mxu0 0
    %521 = vmatpush1.bf16.msra.mxu0 %v501
    %522 = vmatprep.subr.bf16.mxu0 0
    %523 = vmatpush1.bf16.msra.mxu0 %v502
    %524 = vmatprep.subr.bf16.mxu0 0
    %525 = vmatpush1.bf16.msra.mxu0 %v503
    %526 = vmatprep.subr.bf16.mxu0 0
    %527 = vmatpush1.bf16.msra.mxu0 %v504
    %528 = vmatprep.subr.bf16.mxu0 0
    %529 = vmatpush1.bf16.msra.mxu0 %v505
    %530 = vmatprep.subr.bf16.mxu0 0
    %531 = vmatpush1.bf16.msra.mxu0 0
    %532 = vmatprep.subr.bf16.mxu0 0
    %533 = vmatpush1.bf16.msra.mxu0 0
    %534 = vmatprep.subr.bf16.mxu0 0
    %535 = vmatpush1.bf16.msra.mxu0 0
    %536 = vmatprep.subr.bf16.mxu0 0
    %537 = vmatpush1.bf16.msra.mxu0 0
    %538 = vmatprep.subr.bf16.mxu0 0
    %539 = vmatpush1.bf16.msra.mxu0 0
    %540 = vmatprep.subr.bf16.mxu0 0
    %541 = vmatpush1.bf16.msra.mxu0 0
    %542 = vmatprep.subr.bf16.mxu0 0
    %543 = vmatpush1.bf16.msra.mxu0 0
    %544 = vmatprep.subr.bf16.mxu0 0
    %545 = vmatpush1.bf16.msra.mxu0 0
    %546 = vmatprep.mubr.bf16.mxu0 0
    %547 = vmatmul.mubr.bf16.gmra.mrb[0].mxu0 %v429
    %v548 = vpop.f32.mrb[0].mxu0
    %v549 = vadd.f32 %v465, %v548
    %v550 = vpop.f32.mrb[0].mxu0
    %v551 = vpop.f32.mrb[0].mxu0
    %v552 = vadd.f32 %v465, %v551
    %v553 = vpop.f32.mrb[0].mxu0
    %554 = vmatprep.mubr.bf16.mxu0 0
    %555 = vmatmul.mubr.bf16.gmra.mrb[0].mxu0 %v430
    %v556 = vpop.f32.mrb[0].mxu0
    %v557 = vadd.f32 %v465, %v556
    %v558 = vpop.f32.mrb[0].mxu0
    %v559 = vpop.f32.mrb[0].mxu0
    %v560 = vadd.f32 %v465, %v559
    %v561 = vpop.f32.mrb[0].mxu0
    %562 = vmatprep.mubr.bf16.mxu0 0
    %563 = vmatmul.mubr.bf16.gmra.mrb[0].mxu0 %v431
    %v564 = vpop.f32.mrb[0].mxu0
    %v565 = vadd.f32 %v465, %v564
    %v566 = vpop.f32.mrb[0].mxu0
    %v567 = vpop.f32.mrb[0].mxu0
    %v568 = vadd.f32 %v465, %v567
    %v569 = vpop.f32.mrb[0].mxu0
    %570 = vmatprep.mubr.bf16.mxu0 0
    %571 = vmatmul.mubr.bf16.gmra.mrb[0].mxu0 %v432
    %v572 = vpop.f32.mrb[0].mxu0
    %v573 = vadd.f32 %v465, %v572
    %v574 = vpop.f32.mrb[0].mxu0
    %v575 = vpop.f32.mrb[0].mxu0
    %v576 = vadd.f32 %v465, %v575
    %v577 = vpop.f32.mrb[0].mxu0
    %578 = vmatprep.mubr.bf16.mxu0 0
    %579 = vmatmul.mubr.bf16.gmra.mrb[0].mxu0 %v433
    %v580 = vpop.f32.mrb[0].mxu0
    %v581 = vadd.f32 %v465, %v580
    %v582 = vpop.f32.mrb[0].mxu0
    %v583 = vpop.f32.mrb[0].mxu0
    %v584 = vadd.f32 %v465, %v583
    %v585 = vpop.f32.mrb[0].mxu0
    %586 = vmatprep.mubr.bf16.mxu0 0
    %587 = vmatmul.mubr.bf16.gmra.mrb[0].mxu0 %v434
    %v588 = vpop.f32.mrb[0].mxu0
    %v589 = vadd.f32 %v465, %v588
    %v590 = vpop.f32.mrb[0].mxu0
    %v591 = vpop.f32.mrb[0].mxu0
    %v592 = vadd.f32 %v465, %v591
    %v593 = vpop.f32.mrb[0].mxu0
    %594 = vmatprep.mubr.bf16.mxu0 0
    %595 = vmatmul.mubr.bf16.gmra.mrb[0].mxu0 %v435
    %v596 = vpop.f32.mrb[0].mxu0
    %v597 = vadd.f32 %v465, %v596
    %v598 = vpop.f32.mrb[0].mxu0
    %v599 = vpop.f32.mrb[0].mxu0
    %v600 = vadd.f32 %v465, %v599
    %v601 = vpop.f32.mrb[0].mxu0
    %602 = vmatprep.mubr.bf16.mxu0 0
    %603 = vmatmul.mubr.bf16.gmra.mrb[0].mxu0 %v436
    %v604 = vpop.f32.mrb[0].mxu0
    %v605 = vadd.f32 %v465, %v604
    %v606 = vpop.f32.mrb[0].mxu0
    %v607 = vpop.f32.mrb[0].mxu0
    %v608 = vadd.f32 %v465, %v607
    %v609 = vpop.f32.mrb[0].mxu0
    %610 = vmatprep.mubr.bf16.mxu0 0
    %611 = vmatmul.mubr.bf16.gmra.mrb[0].mxu0 %v437
    %v612 = vpop.f32.mrb[0].mxu0
    %v613 = vadd.f32 %v465, %v612
    %v614 = vpop.f32.mrb[0].mxu0
    %v615 = vpop.f32.mrb[0].mxu0
    %v616 = vadd.f32 %v465, %v615
    %v617 = vpop.f32.mrb[0].mxu0
    %618 = vmatprep.mubr.bf16.mxu0 0
    %619 = vmatmul.mubr.bf16.gmra.mrb[0].mxu0 %v438
    %v620 = vpop.f32.mrb[0].mxu0
    %v621 = vadd.f32 %v465, %v620
    %v622 = vpop.f32.mrb[0].mxu0
    %v623 = vpop.f32.mrb[0].mxu0
    %v624 = vadd.f32 %v465, %v623
    %v625 = vpop.f32.mrb[0].mxu0
    %626 = vmatprep.mubr.bf16.mxu0 0
    %627 = vmatmul.mubr.bf16.gmra.mrb[0].mxu0 %v439
    %v628 = vpop.f32.mrb[0].mxu0
    %v629 = vadd.f32 %v465, %v628
    %v630 = vpop.f32.mrb[0].mxu0
    %v631 = vpop.f32.mrb[0].mxu0
    %v632 = vadd.f32 %v465, %v631
    %v633 = vpop.f32.mrb[0].mxu0
    %634 = vmatprep.mubr.bf16.mxu0 0
    %635 = vmatmul.mubr.bf16.gmra.mrb[0].mxu0 %v440
    %v636 = vpop.f32.mrb[0].mxu0
    %v637 = vadd.f32 %v465, %v636
    %v638 = vpop.f32.mrb[0].mxu0
    %v639 = vpop.f32.mrb[0].mxu0
    %v640 = vadd.f32 %v465, %v639
    %v641 = vpop.f32.mrb[0].mxu0
    %642 = vmatprep.mubr.bf16.mxu0 0
    %643 = vmatmul.mubr.bf16.gmra.mrb[0].mxu0 %v441
    %v644 = vpop.f32.mrb[0].mxu0
    %v645 = vadd.f32 %v465, %v644
    %v646 = vpop.f32.mrb[0].mxu0
    %v647 = vpop.f32.mrb[0].mxu0
    %v648 = vadd.f32 %v465, %v647
    %v649 = vpop.f32.mrb[0].mxu0
    %650 = vmatprep.mubr.bf16.mxu0 0
    %651 = vmatmul.mubr.bf16.gmra.mrb[0].mxu0 %v442
    %v652 = vpop.f32.mrb[0].mxu0
    %v653 = vadd.f32 %v465, %v652
    %v654 = vpop.f32.mrb[0].mxu0
    %v655 = vpop.f32.mrb[0].mxu0
    %v656 = vadd.f32 %v465, %v655
    %v657 = vpop.f32.mrb[0].mxu0
    %658 = vmatprep.mubr.bf16.mxu0 0
    %659 = vmatmul.mubr.bf16.gmra.mrb[0].mxu0 %v443
    %v660 = vpop.f32.mrb[0].mxu0
    %v661 = vadd.f32 %v465, %v660
    %v662 = vpop.f32.mrb[0].mxu0
    %v663 = vpop.f32.mrb[0].mxu0
    %v664 = vadd.f32 %v465, %v663
    %v665 = vpop.f32.mrb[0].mxu0
    %666 = vmatprep.mubr.bf16.mxu0 0
    %667 = vmatmul.mubr.bf16.gmra.mrb[0].mxu0 %v444
    %v668 = vpop.f32.mrb[0].mxu0
    %v669 = vadd.f32 %v465, %v668
    %v670 = vpop.f32.mrb[0].mxu0
    %v671 = vpop.f32.mrb[0].mxu0
    %v672 = vadd.f32 %v465, %v671
    %v673 = vpop.f32.mrb[0].mxu0
    %674 = vdwg.mxu0
    %v675 = vmax.f32 %v549, 0.0
    %v676 = vmax.f32 %v552, 0.0
    %v677 = vmax.f32 %v557, 0.0
    %v678 = vmax.f32 %v560, 0.0
    %v679 = vmax.f32 %v565, 0.0
    %v680 = vmax.f32 %v568, 0.0
    %v681 = vmax.f32 %v573, 0.0
    %v682 = vmax.f32 %v576, 0.0
    %v683 = vmax.f32 %v581, 0.0
    %v684 = vmax.f32 %v584, 0.0
    %v685 = vmax.f32 %v589, 0.0
    %v686 = vmax.f32 %v592, 0.0
    %v687 = vmax.f32 %v597, 0.0
    %v688 = vmax.f32 %v600, 0.0
    %v689 = vmax.f32 %v605, 0.0
    %v690 = vmax.f32 %v608, 0.0
    %v691 = vmax.f32 %v613, 0.0
    %v692 = vmax.f32 %v616, 0.0
    %v693 = vmax.f32 %v621, 0.0
    %v694 = vmax.f32 %v624, 0.0
    %v695 = vmax.f32 %v629, 0.0
    %v696 = vmax.f32 %v632, 0.0
    %v697 = vmax.f32 %v637, 0.0
    %v698 = vmax.f32 %v640, 0.0
    %v699 = vmax.f32 %v645, 0.0
    %v700 = vmax.f32 %v648, 0.0
    %v701 = vmax.f32 %v653, 0.0
    %v702 = vmax.f32 %v656, 0.0
    %v703 = vmax.f32 %v661, 0.0
    %v704 = vmax.f32 %v664, 0.0
    %v705 = vmax.f32 %v669, 0.0
    %v706 = vmax.f32 %v672, 0.0
    %v707 = vpack.c.bf16 %v676, %v675
    %v708 = vpack.c.bf16 %v678, %v677
    %v709 = vpack.c.bf16 %v680, %v679
    %v710 = vpack.c.bf16 %v682, %v681
    %v711 = vpack.c.bf16 %v684, %v683
    %v712 = vpack.c.bf16 %v686, %v685
    %v713 = vpack.c.bf16 %v688, %v687
    %v714 = vpack.c.bf16 %v690, %v689
    %v715 = vpack.c.bf16 %v692, %v691
    %v716 = vpack.c.bf16 %v694, %v693
    %v717 = vpack.c.bf16 %v696, %v695
    %v718 = vpack.c.bf16 %v698, %v697
    %v719 = vpack.c.bf16 %v700, %v699
    %v720 = vpack.c.bf16 %v702, %v701
    %v721 = vpack.c.bf16 %v704, %v703
    %v722 = vpack.c.bf16 %v706, %v705
    %s723 = scalar_lea.vmem [#allocation2], 64
    %v724 = vld [vmem:[%s723] sm:$0xf]
    %v725 = vld [vmem:[%s723 + $0x4] sm:$0xf]
    %v726 = vld [vmem:[%s723 + $0x8] sm:$0xf]
    %v727 = vld [vmem:[%s723 + $0xc] sm:$0xf]
    %v728 = vld [vmem:[%s723 + $0x10] sm:$0xf]
    %v729 = vld [vmem:[%s723 + $0x14] sm:$0xf]
    %v730 = vld [vmem:[%s723 + $0x18] sm:$0xf]
    %v731 = vld [vmem:[%s723 + $0x1c] sm:$0xf]
    %v732 = vld [vmem:[%s723 + $0x20] sm:$0xf]
    %v733 = vld [vmem:[%s723 + $0x24] sm:$0xf]
    %v734 = vld [vmem:[%s723 + $0x28] sm:$0xf]
    %v735 = vld [vmem:[%s723 + $0x2c] sm:$0xf]
    %v736 = vld [vmem:[%s723 + $0x30] sm:$0xf]
    %v737 = vld [vmem:[%s723 + $0x34] sm:$0xf]
    %v738 = vld [vmem:[%s723 + $0x38] sm:$0xf]
    %v739 = vld [vmem:[%s723 + $0x3c] sm:$0xf]
    %v740 = vld [vmem:[%s4 + $0x2] sm:$0x1]
    %v741 = vlaneseq
    %v742 = vshrl.u32 %v741, 7
    %v743 = vsub.s32 0, %v742
    %v744 = vrot.slane %v740, %v743
    %v761 = vunpack.c.l.b16 %v724
    %v762 = vunpack.c.l.b16 %v725
    %v763 = vunpack.c.l.b16 %v726
    %v764 = vunpack.c.l.b16 %v727
    %v765 = vunpack.c.l.b16 %v728
    %v766 = vunpack.c.l.b16 %v729
    %v767 = vunpack.c.l.b16 %v730
    %v768 = vunpack.c.l.b16 %v731
    %v769 = vunpack.c.l.b16 %v732
    %v770 = vunpack.c.l.b16 %v733
    %v771 = vunpack.c.l.b16 %v734
    %v772 = vunpack.c.l.b16 %v735
    %v773 = vunpack.c.l.b16 %v736
    %v774 = vunpack.c.l.b16 %v737
    %v775 = vunpack.c.l.b16 %v738
    %v776 = vunpack.c.l.b16 %v739
    %v777 = vpack.c.b16 %v762, %v761
    %v778 = vpack.c.b16 %v764, %v763
    %v779 = vpack.c.b16 %v766, %v765
    %v780 = vpack.c.b16 %v768, %v767
    %v781 = vpack.c.b16 %v770, %v769
    %v782 = vpack.c.b16 %v772, %v771
    %v783 = vpack.c.b16 %v774, %v773
    %v784 = vpack.c.b16 %v776, %v775
    %793 = vmatprep.subr.bf16.mxu0 0
    %794 = vmatpush1.bf16.msra.mxu0 %v777
    %795 = vmatprep.subr.bf16.mxu0 0
    %796 = vmatpush1.bf16.msra.mxu0 %v778
    %797 = vmatprep.subr.bf16.mxu0 0
    %798 = vmatpush1.bf16.msra.mxu0 %v779
    %799 = vmatprep.subr.bf16.mxu0 0
    %800 = vmatpush1.bf16.msra.mxu0 %v780
    %801 = vmatprep.subr.bf16.mxu0 0
    %802 = vmatpush1.bf16.msra.mxu0 %v781
    %803 = vmatprep.subr.bf16.mxu0 0
    %804 = vmatpush1.bf16.msra.mxu0 %v782
    %805 = vmatprep.subr.bf16.mxu0 0
    %806 = vmatpush1.bf16.msra.mxu0 %v783
    %807 = vmatprep.subr.bf16.mxu0 0
    %808 = vmatpush1.bf16.msra.mxu0 %v784
    %809 = vmatprep.subr.bf16.mxu0 0
    %810 = vmatpush1.bf16.msra.mxu0 0
    %811 = vmatprep.subr.bf16.mxu0 0
    %812 = vmatpush1.bf16.msra.mxu0 0
    %813 = vmatprep.subr.bf16.mxu0 0
    %814 = vmatpush1.bf16.msra.mxu0 0
    %815 = vmatprep.subr.bf16.mxu0 0
    %816 = vmatpush1.bf16.msra.mxu0 0
    %817 = vmatprep.subr.bf16.mxu0 0
    %818 = vmatpush1.bf16.msra.mxu0 0
    %819 = vmatprep.subr.bf16.mxu0 0
    %820 = vmatpush1.bf16.msra.mxu0 0
    %821 = vmatprep.subr.bf16.mxu0 0
    %822 = vmatpush1.bf16.msra.mxu0 0
    %823 = vmatprep.subr.bf16.mxu0 0
    %824 = vmatpush1.bf16.msra.mxu0 0
    %825 = vmatprep.mubr.bf16.mxu0 0
    %826 = vmatmul.mubr.bf16.gmra.mrb[0].mxu0 %v707
    %v827 = vpop.f32.mrb[0].mxu0
    %v828 = vadd.f32 %v744, %v827
    %v829 = vpop.f32.mrb[0].mxu0
    %v830 = vpop.f32.mrb[0].mxu0
    %v831 = vadd.f32 %v744, %v830
    %v832 = vpop.f32.mrb[0].mxu0
    %833 = vmatprep.mubr.bf16.mxu0 0
    %834 = vmatmul.mubr.bf16.gmra.mrb[0].mxu0 %v708
    %v835 = vpop.f32.mrb[0].mxu0
    %v836 = vadd.f32 %v744, %v835
    %v837 = vpop.f32.mrb[0].mxu0
    %v838 = vpop.f32.mrb[0].mxu0
    %v839 = vadd.f32 %v744, %v838
    %v840 = vpop.f32.mrb[0].mxu0
    %841 = vmatprep.mubr.bf16.mxu0 0
    %842 = vmatmul.mubr.bf16.gmra.mrb[0].mxu0 %v709
    %v843 = vpop.f32.mrb[0].mxu0
    %v844 = vadd.f32 %v744, %v843
    %v845 = vpop.f32.mrb[0].mxu0
    %v846 = vpop.f32.mrb[0].mxu0
    %v847 = vadd.f32 %v744, %v846
    %v848 = vpop.f32.mrb[0].mxu0
    %849 = vmatprep.mubr.bf16.mxu0 0
    %850 = vmatmul.mubr.bf16.gmra.mrb[0].mxu0 %v710
    %v851 = vpop.f32.mrb[0].mxu0
    %v852 = vadd.f32 %v744, %v851
    %v853 = vpop.f32.mrb[0].mxu0
    %v854 = vpop.f32.mrb[0].mxu0
    %v855 = vadd.f32 %v744, %v854
    %v856 = vpop.f32.mrb[0].mxu0
    %857 = vmatprep.mubr.bf16.mxu0 0
    %858 = vmatmul.mubr.bf16.gmra.mrb[0].mxu0 %v711
    %v859 = vpop.f32.mrb[0].mxu0
    %v860 = vadd.f32 %v744, %v859
    %v861 = vpop.f32.mrb[0].mxu0
    %v862 = vpop.f32.mrb[0].mxu0
    %v863 = vadd.f32 %v744, %v862
    %v864 = vpop.f32.mrb[0].mxu0
    %865 = vmatprep.mubr.bf16.mxu0 0
    %866 = vmatmul.mubr.bf16.gmra.mrb[0].mxu0 %v712
    %v867 = vpop.f32.mrb[0].mxu0
    %v868 = vadd.f32 %v744, %v867
    %v869 = vpop.f32.mrb[0].mxu0
    %v870 = vpop.f32.mrb[0].mxu0
    %v871 = vadd.f32 %v744, %v870
    %v872 = vpop.f32.mrb[0].mxu0
    %873 = vmatprep.mubr.bf16.mxu0 0
    %874 = vmatmul.mubr.bf16.gmra.mrb[0].mxu0 %v713
    %v875 = vpop.f32.mrb[0].mxu0
    %v876 = vadd.f32 %v744, %v875
    %v877 = vpop.f32.mrb[0].mxu0
    %v878 = vpop.f32.mrb[0].mxu0
    %v879 = vadd.f32 %v744, %v878
    %v880 = vpop.f32.mrb[0].mxu0
    %881 = vmatprep.mubr.bf16.mxu0 0
    %882 = vmatmul.mubr.bf16.gmra.mrb[0].mxu0 %v714
    %v883 = vpop.f32.mrb[0].mxu0
    %v884 = vadd.f32 %v744, %v883
    %v885 = vpop.f32.mrb[0].mxu0
    %v886 = vpop.f32.mrb[0].mxu0
    %v887 = vadd.f32 %v744, %v886
    %v888 = vpop.f32.mrb[0].mxu0
    %889 = vmatprep.mubr.bf16.mxu0 0
    %890 = vmatmul.mubr.bf16.gmra.mrb[0].mxu0 %v715
    %v891 = vpop.f32.mrb[0].mxu0
    %v892 = vadd.f32 %v744, %v891
    %v893 = vpop.f32.mrb[0].mxu0
    %v894 = vpop.f32.mrb[0].mxu0
    %v895 = vadd.f32 %v744, %v894
    %v896 = vpop.f32.mrb[0].mxu0
    %897 = vmatprep.mubr.bf16.mxu0 0
    %898 = vmatmul.mubr.bf16.gmra.mrb[0].mxu0 %v716
    %v899 = vpop.f32.mrb[0].mxu0
    %v900 = vadd.f32 %v744, %v899
    %v901 = vpop.f32.mrb[0].mxu0
    %v902 = vpop.f32.mrb[0].mxu0
    %v903 = vadd.f32 %v744, %v902
    %v904 = vpop.f32.mrb[0].mxu0
    %905 = vmatprep.mubr.bf16.mxu0 0
    %906 = vmatmul.mubr.bf16.gmra.mrb[0].mxu0 %v717
    %v907 = vpop.f32.mrb[0].mxu0
    %v908 = vadd.f32 %v744, %v907
    %v909 = vpop.f32.mrb[0].mxu0
    %v910 = vpop.f32.mrb[0].mxu0
    %v911 = vadd.f32 %v744, %v910
    %v912 = vpop.f32.mrb[0].mxu0
    %913 = vmatprep.mubr.bf16.mxu0 0
    %914 = vmatmul.mubr.bf16.gmra.mrb[0].mxu0 %v718
    %v915 = vpop.f32.mrb[0].mxu0
    %v916 = vadd.f32 %v744, %v915
    %v917 = vpop.f32.mrb[0].mxu0
    %v918 = vpop.f32.mrb[0].mxu0
    %v919 = vadd.f32 %v744, %v918
    %v920 = vpop.f32.mrb[0].mxu0
    %921 = vmatprep.mubr.bf16.mxu0 0
    %922 = vmatmul.mubr.bf16.gmra.mrb[0].mxu0 %v719
    %v923 = vpop.f32.mrb[0].mxu0
    %v924 = vadd.f32 %v744, %v923
    %v925 = vpop.f32.mrb[0].mxu0
    %v926 = vpop.f32.mrb[0].mxu0
    %v927 = vadd.f32 %v744, %v926
    %v928 = vpop.f32.mrb[0].mxu0
    %929 = vmatprep.mubr.bf16.mxu0 0
    %930 = vmatmul.mubr.bf16.gmra.mrb[0].mxu0 %v720
    %v931 = vpop.f32.mrb[0].mxu0
    %v932 = vadd.f32 %v744, %v931
    %v933 = vpop.f32.mrb[0].mxu0
    %v934 = vpop.f32.mrb[0].mxu0
    %v935 = vadd.f32 %v744, %v934
    %v936 = vpop.f32.mrb[0].mxu0
    %937 = vmatprep.mubr.bf16.mxu0 0
    %938 = vmatmul.mubr.bf16.gmra.mrb[0].mxu0 %v721
    %v939 = vpop.f32.mrb[0].mxu0
    %v940 = vadd.f32 %v744, %v939
    %v941 = vpop.f32.mrb[0].mxu0
    %v942 = vpop.f32.mrb[0].mxu0
    %v943 = vadd.f32 %v744, %v942
    %v944 = vpop.f32.mrb[0].mxu0
    %945 = vmatprep.mubr.bf16.mxu0 0
    %946 = vmatmul.mubr.bf16.gmra.mrb[0].mxu0 %v722
    %v947 = vpop.f32.mrb[0].mxu0
    %v948 = vadd.f32 %v744, %v947
    %v949 = vpop.f32.mrb[0].mxu0
    %v950 = vpop.f32.mrb[0].mxu0
    %v951 = vadd.f32 %v744, %v950
    %v952 = vpop.f32.mrb[0].mxu0
    %953 = vdwg.mxu0
    %v954 = vmax.f32 %v828, 0.0
    %v955 = vmax.f32 %v831, 0.0
    %v956 = vmax.f32 %v836, 0.0
    %v957 = vmax.f32 %v839, 0.0
    %v958 = vmax.f32 %v844, 0.0
    %v959 = vmax.f32 %v847, 0.0
    %v960 = vmax.f32 %v852, 0.0
    %v961 = vmax.f32 %v855, 0.0
    %v962 = vmax.f32 %v860, 0.0
    %v963 = vmax.f32 %v863, 0.0
    %v964 = vmax.f32 %v868, 0.0
    %v965 = vmax.f32 %v871, 0.0
    %v966 = vmax.f32 %v876, 0.0
    %v967 = vmax.f32 %v879, 0.0
    %v968 = vmax.f32 %v884, 0.0
    %v969 = vmax.f32 %v887, 0.0
    %v970 = vmax.f32 %v892, 0.0
    %v971 = vmax.f32 %v895, 0.0
    %v972 = vmax.f32 %v900, 0.0
    %v973 = vmax.f32 %v903, 0.0
    %v974 = vmax.f32 %v908, 0.0
    %v975 = vmax.f32 %v911, 0.0
    %v976 = vmax.f32 %v916, 0.0
    %v977 = vmax.f32 %v919, 0.0
    %v978 = vmax.f32 %v924, 0.0
    %v979 = vmax.f32 %v927, 0.0
    %v980 = vmax.f32 %v932, 0.0
    %v981 = vmax.f32 %v935, 0.0
    %v982 = vmax.f32 %v940, 0.0
    %v983 = vmax.f32 %v943, 0.0
    %v984 = vmax.f32 %v948, 0.0
    %v985 = vmax.f32 %v951, 0.0
    %v986 = vpack.c.bf16 %v955, %v954
    %v987 = vpack.c.bf16 %v957, %v956
    %v988 = vpack.c.bf16 %v959, %v958
    %v989 = vpack.c.bf16 %v961, %v960
    %v990 = vpack.c.bf16 %v963, %v962
    %v991 = vpack.c.bf16 %v965, %v964
    %v992 = vpack.c.bf16 %v967, %v966
    %v993 = vpack.c.bf16 %v969, %v968
    %v994 = vpack.c.bf16 %v971, %v970
    %v995 = vpack.c.bf16 %v973, %v972
    %v996 = vpack.c.bf16 %v975, %v974
    %v997 = vpack.c.bf16 %v977, %v976
    %v998 = vpack.c.bf16 %v979, %v978
    %v999 = vpack.c.bf16 %v981, %v980
    %v1000 = vpack.c.bf16 %v983, %v982
    %v1001 = vpack.c.bf16 %v985, %v984
    %s1002 = scalar_lea.vmem [#allocation2], 128
    %v1003 = vld [vmem:[%s1002] sm:$0xf]
    %v1004 = vld [vmem:[%s1002 + $0x4] sm:$0xf]
    %v1005 = vld [vmem:[%s1002 + $0x8] sm:$0xf]
    %v1006 = vld [vmem:[%s1002 + $0xc] sm:$0xf]
    %v1007 = vld [vmem:[%s1002 + $0x10] sm:$0xf]
    %v1008 = vld [vmem:[%s1002 + $0x14] sm:$0xf]
    %v1009 = vld [vmem:[%s1002 + $0x18] sm:$0xf]
    %v1010 = vld [vmem:[%s1002 + $0x1c] sm:$0xf]
    %v1011 = vld [vmem:[%s1002 + $0x20] sm:$0xf]
    %v1012 = vld [vmem:[%s1002 + $0x24] sm:$0xf]
    %v1013 = vld [vmem:[%s1002 + $0x28] sm:$0xf]
    %v1014 = vld [vmem:[%s1002 + $0x2c] sm:$0xf]
    %v1015 = vld [vmem:[%s1002 + $0x30] sm:$0xf]
    %v1016 = vld [vmem:[%s1002 + $0x34] sm:$0xf]
    %v1017 = vld [vmem:[%s1002 + $0x38] sm:$0xf]
    %v1018 = vld [vmem:[%s1002 + $0x3c] sm:$0xf]
    %v1019 = vld [vmem:[%s4 + $0x3] sm:$0x1]
    %v1020 = vlaneseq
    %v1021 = vshrl.u32 %v1020, 7
    %v1022 = vsub.s32 0, %v1021
    %v1023 = vrot.slane %v1019, %v1022
    %v1040 = vunpack.c.l.b16 %v1003
    %v1041 = vunpack.c.l.b16 %v1004
    %v1042 = vunpack.c.l.b16 %v1005
    %v1043 = vunpack.c.l.b16 %v1006
    %v1044 = vunpack.c.l.b16 %v1007
    %v1045 = vunpack.c.l.b16 %v1008
    %v1046 = vunpack.c.l.b16 %v1009
    %v1047 = vunpack.c.l.b16 %v1010
    %v1048 = vunpack.c.l.b16 %v1011
    %v1049 = vunpack.c.l.b16 %v1012
    %v1050 = vunpack.c.l.b16 %v1013
    %v1051 = vunpack.c.l.b16 %v1014
    %v1052 = vunpack.c.l.b16 %v1015
    %v1053 = vunpack.c.l.b16 %v1016
    %v1054 = vunpack.c.l.b16 %v1017
    %v1055 = vunpack.c.l.b16 %v1018
    %v1056 = vpack.c.b16 %v1041, %v1040
    %v1057 = vpack.c.b16 %v1043, %v1042
    %v1058 = vpack.c.b16 %v1045, %v1044
    %v1059 = vpack.c.b16 %v1047, %v1046
    %v1060 = vpack.c.b16 %v1049, %v1048
    %v1061 = vpack.c.b16 %v1051, %v1050
    %v1062 = vpack.c.b16 %v1053, %v1052
    %v1063 = vpack.c.b16 %v1055, %v1054
    %1072 = vmatprep.subr.bf16.mxu0 0
    %1073 = vmatpush1.bf16.msra.mxu0 %v1056
    %1074 = vmatprep.subr.bf16.mxu0 0
    %1075 = vmatpush1.bf16.msra.mxu0 %v1057
    %1076 = vmatprep.subr.bf16.mxu0 0
    %1077 = vmatpush1.bf16.msra.mxu0 %v1058
    %1078 = vmatprep.subr.bf16.mxu0 0
    %1079 = vmatpush1.bf16.msra.mxu0 %v1059
    %1080 = vmatprep.subr.bf16.mxu0 0
    %1081 = vmatpush1.bf16.msra.mxu0 %v1060
    %1082 = vmatprep.subr.bf16.mxu0 0
    %1083 = vmatpush1.bf16.msra.mxu0 %v1061
    %1084 = vmatprep.subr.bf16.mxu0 0
    %1085 = vmatpush1.bf16.msra.mxu0 %v1062
    %1086 = vmatprep.subr.bf16.mxu0 0
    %1087 = vmatpush1.bf16.msra.mxu0 %v1063
    %1088 = vmatprep.subr.bf16.mxu0 0
    %1089 = vmatpush1.bf16.msra.mxu0 0
    %1090 = vmatprep.subr.bf16.mxu0 0
    %1091 = vmatpush1.bf16.msra.mxu0 0
    %1092 = vmatprep.subr.bf16.mxu0 0
    %1093 = vmatpush1.bf16.msra.mxu0 0
    %1094 = vmatprep.subr.bf16.mxu0 0
    %1095 = vmatpush1.bf16.msra.mxu0 0
    %1096 = vmatprep.subr.bf16.mxu0 0
    %1097 = vmatpush1.bf16.msra.mxu0 0
    %1098 = vmatprep.subr.bf16.mxu0 0
    %1099 = vmatpush1.bf16.msra.mxu0 0
    %1100 = vmatprep.subr.bf16.mxu0 0
    %1101 = vmatpush1.bf16.msra.mxu0 0
    %1102 = vmatprep.subr.bf16.mxu0 0
    %1103 = vmatpush1.bf16.msra.mxu0 0
    %1104 = vmatprep.mubr.bf16.mxu0 0
    %1105 = vmatmul.mubr.bf16.gmra.mrb[0].mxu0 %v986
    %v1106 = vpop.f32.mrb[0].mxu0
    %v1107 = vadd.f32 %v1023, %v1106
    %v1108 = vpop.f32.mrb[0].mxu0
    %v1109 = vpop.f32.mrb[0].mxu0
    %v1110 = vadd.f32 %v1023, %v1109
    %v1111 = vpop.f32.mrb[0].mxu0
    %1112 = vmatprep.mubr.bf16.mxu0 0
    %1113 = vmatmul.mubr.bf16.gmra.mrb[0].mxu0 %v987
    %v1114 = vpop.f32.mrb[0].mxu0
    %v1115 = vadd.f32 %v1023, %v1114
    %v1116 = vpop.f32.mrb[0].mxu0
    %v1117 = vpop.f32.mrb[0].mxu0
    %v1118 = vadd.f32 %v1023, %v1117
    %v1119 = vpop.f32.mrb[0].mxu0
    %1120 = vmatprep.mubr.bf16.mxu0 0
    %1121 = vmatmul.mubr.bf16.gmra.mrb[0].mxu0 %v988
    %v1122 = vpop.f32.mrb[0].mxu0
    %v1123 = vadd.f32 %v1023, %v1122
    %v1124 = vpop.f32.mrb[0].mxu0
    %v1125 = vpop.f32.mrb[0].mxu0
    %v1126 = vadd.f32 %v1023, %v1125
    %v1127 = vpop.f32.mrb[0].mxu0
    %1128 = vmatprep.mubr.bf16.mxu0 0
    %1129 = vmatmul.mubr.bf16.gmra.mrb[0].mxu0 %v989
    %v1130 = vpop.f32.mrb[0].mxu0
    %v1131 = vadd.f32 %v1023, %v1130
    %v1132 = vpop.f32.mrb[0].mxu0
    %v1133 = vpop.f32.mrb[0].mxu0
    %v1134 = vadd.f32 %v1023, %v1133
    %v1135 = vpop.f32.mrb[0].mxu0
    %1136 = vmatprep.mubr.bf16.mxu0 0
    %1137 = vmatmul.mubr.bf16.gmra.mrb[0].mxu0 %v990
    %v1138 = vpop.f32.mrb[0].mxu0
    %v1139 = vadd.f32 %v1023, %v1138
    %v1140 = vpop.f32.mrb[0].mxu0
    %v1141 = vpop.f32.mrb[0].mxu0
    %v1142 = vadd.f32 %v1023, %v1141
    %v1143 = vpop.f32.mrb[0].mxu0
    %1144 = vmatprep.mubr.bf16.mxu0 0
    %1145 = vmatmul.mubr.bf16.gmra.mrb[0].mxu0 %v991
    %v1146 = vpop.f32.mrb[0].mxu0
    %v1147 = vadd.f32 %v1023, %v1146
    %v1148 = vpop.f32.mrb[0].mxu0
    %v1149 = vpop.f32.mrb[0].mxu0
    %v1150 = vadd.f32 %v1023, %v1149
    %v1151 = vpop.f32.mrb[0].mxu0
    %1152 = vmatprep.mubr.bf16.mxu0 0
    %1153 = vmatmul.mubr.bf16.gmra.mrb[0].mxu0 %v992
    %v1154 = vpop.f32.mrb[0].mxu0
    %v1155 = vadd.f32 %v1023, %v1154
    %v1156 = vpop.f32.mrb[0].mxu0
    %v1157 = vpop.f32.mrb[0].mxu0
    %v1158 = vadd.f32 %v1023, %v1157
    %v1159 = vpop.f32.mrb[0].mxu0
    %1160 = vmatprep.mubr.bf16.mxu0 0
    %1161 = vmatmul.mubr.bf16.gmra.mrb[0].mxu0 %v993
    %v1162 = vpop.f32.mrb[0].mxu0
    %v1163 = vadd.f32 %v1023, %v1162
    %v1164 = vpop.f32.mrb[0].mxu0
    %v1165 = vpop.f32.mrb[0].mxu0
    %v1166 = vadd.f32 %v1023, %v1165
    %v1167 = vpop.f32.mrb[0].mxu0
    %1168 = vmatprep.mubr.bf16.mxu0 0
    %1169 = vmatmul.mubr.bf16.gmra.mrb[0].mxu0 %v994
    %v1170 = vpop.f32.mrb[0].mxu0
    %v1171 = vadd.f32 %v1023, %v1170
    %v1172 = vpop.f32.mrb[0].mxu0
    %v1173 = vpop.f32.mrb[0].mxu0
    %v1174 = vadd.f32 %v1023, %v1173
    %v1175 = vpop.f32.mrb[0].mxu0
    %1176 = vmatprep.mubr.bf16.mxu0 0
    %1177 = vmatmul.mubr.bf16.gmra.mrb[0].mxu0 %v995
    %v1178 = vpop.f32.mrb[0].mxu0
    %v1179 = vadd.f32 %v1023, %v1178
    %v1180 = vpop.f32.mrb[0].mxu0
    %v1181 = vpop.f32.mrb[0].mxu0
    %v1182 = vadd.f32 %v1023, %v1181
    %v1183 = vpop.f32.mrb[0].mxu0
    %1184 = vmatprep.mubr.bf16.mxu0 0
    %1185 = vmatmul.mubr.bf16.gmra.mrb[0].mxu0 %v996
    %v1186 = vpop.f32.mrb[0].mxu0
    %v1187 = vadd.f32 %v1023, %v1186
    %v1188 = vpop.f32.mrb[0].mxu0
    %v1189 = vpop.f32.mrb[0].mxu0
    %v1190 = vadd.f32 %v1023, %v1189
    %v1191 = vpop.f32.mrb[0].mxu0
    %1192 = vmatprep.mubr.bf16.mxu0 0
    %1193 = vmatmul.mubr.bf16.gmra.mrb[0].mxu0 %v997
    %v1194 = vpop.f32.mrb[0].mxu0
    %v1195 = vadd.f32 %v1023, %v1194
    %v1196 = vpop.f32.mrb[0].mxu0
    %v1197 = vpop.f32.mrb[0].mxu0
    %v1198 = vadd.f32 %v1023, %v1197
    %v1199 = vpop.f32.mrb[0].mxu0
    %1200 = vmatprep.mubr.bf16.mxu0 0
    %1201 = vmatmul.mubr.bf16.gmra.mrb[0].mxu0 %v998
    %v1202 = vpop.f32.mrb[0].mxu0
    %v1203 = vadd.f32 %v1023, %v1202
    %v1204 = vpop.f32.mrb[0].mxu0
    %v1205 = vpop.f32.mrb[0].mxu0
    %v1206 = vadd.f32 %v1023, %v1205
    %v1207 = vpop.f32.mrb[0].mxu0
    %1208 = vmatprep.mubr.bf16.mxu0 0
    %1209 = vmatmul.mubr.bf16.gmra.mrb[0].mxu0 %v999
    %v1210 = vpop.f32.mrb[0].mxu0
    %v1211 = vadd.f32 %v1023, %v1210
    %v1212 = vpop.f32.mrb[0].mxu0
    %v1213 = vpop.f32.mrb[0].mxu0
    %v1214 = vadd.f32 %v1023, %v1213
    %v1215 = vpop.f32.mrb[0].mxu0
    %1216 = vmatprep.mubr.bf16.mxu0 0
    %1217 = vmatmul.mubr.bf16.gmra.mrb[0].mxu0 %v1000
    %v1218 = vpop.f32.mrb[0].mxu0
    %v1219 = vadd.f32 %v1023, %v1218
    %v1220 = vpop.f32.mrb[0].mxu0
    %v1221 = vpop.f32.mrb[0].mxu0
    %v1222 = vadd.f32 %v1023, %v1221
    %v1223 = vpop.f32.mrb[0].mxu0
    %1224 = vmatprep.mubr.bf16.mxu0 0
    %1225 = vmatmul.mubr.bf16.gmra.mrb[0].mxu0 %v1001
    %v1226 = vpop.f32.mrb[0].mxu0
    %v1227 = vadd.f32 %v1023, %v1226
    %v1228 = vpop.f32.mrb[0].mxu0
    %v1229 = vpop.f32.mrb[0].mxu0
    %v1230 = vadd.f32 %v1023, %v1229
    %v1231 = vpop.f32.mrb[0].mxu0
    %1232 = vdwg.mxu0
    %v1233 = vmax.f32 %v1107, 0.0
    %v1234 = vmax.f32 %v1110, 0.0
    %v1235 = vmax.f32 %v1115, 0.0
    %v1236 = vmax.f32 %v1118, 0.0
    %v1237 = vmax.f32 %v1123, 0.0
    %v1238 = vmax.f32 %v1126, 0.0
    %v1239 = vmax.f32 %v1131, 0.0
    %v1240 = vmax.f32 %v1134, 0.0
    %v1241 = vmax.f32 %v1139, 0.0
    %v1242 = vmax.f32 %v1142, 0.0
    %v1243 = vmax.f32 %v1147, 0.0
    %v1244 = vmax.f32 %v1150, 0.0
    %v1245 = vmax.f32 %v1155, 0.0
    %v1246 = vmax.f32 %v1158, 0.0
    %v1247 = vmax.f32 %v1163, 0.0
    %v1248 = vmax.f32 %v1166, 0.0
    %v1249 = vmax.f32 %v1171, 0.0
    %v1250 = vmax.f32 %v1174, 0.0
    %v1251 = vmax.f32 %v1179, 0.0
    %v1252 = vmax.f32 %v1182, 0.0
    %v1253 = vmax.f32 %v1187, 0.0
    %v1254 = vmax.f32 %v1190, 0.0
    %v1255 = vmax.f32 %v1195, 0.0
    %v1256 = vmax.f32 %v1198, 0.0
    %v1257 = vmax.f32 %v1203, 0.0
    %v1258 = vmax.f32 %v1206, 0.0
    %v1259 = vmax.f32 %v1211, 0.0
    %v1260 = vmax.f32 %v1214, 0.0
    %v1261 = vmax.f32 %v1219, 0.0
    %v1262 = vmax.f32 %v1222, 0.0
    %v1263 = vmax.f32 %v1227, 0.0
    %v1264 = vmax.f32 %v1230, 0.0
    %v1265 = vpack.c.bf16 %v1234, %v1233
    %v1266 = vpack.c.bf16 %v1236, %v1235
    %v1267 = vpack.c.bf16 %v1238, %v1237
    %v1268 = vpack.c.bf16 %v1240, %v1239
    %v1269 = vpack.c.bf16 %v1242, %v1241
    %v1270 = vpack.c.bf16 %v1244, %v1243
    %v1271 = vpack.c.bf16 %v1246, %v1245
    %v1272 = vpack.c.bf16 %v1248, %v1247
    %v1273 = vpack.c.bf16 %v1250, %v1249
    %v1274 = vpack.c.bf16 %v1252, %v1251
    %v1275 = vpack.c.bf16 %v1254, %v1253
    %v1276 = vpack.c.bf16 %v1256, %v1255
    %v1277 = vpack.c.bf16 %v1258, %v1257
    %v1278 = vpack.c.bf16 %v1260, %v1259
    %v1279 = vpack.c.bf16 %v1262, %v1261
    %v1280 = vpack.c.bf16 %v1264, %v1263
    %s1281 = scalar_lea.vmem [#allocation2], 192
    %v1282 = vld [vmem:[%s1281] sm:$0xf]
    %v1283 = vld [vmem:[%s1281 + $0x4] sm:$0xf]
    %v1284 = vld [vmem:[%s1281 + $0x8] sm:$0xf]
    %v1285 = vld [vmem:[%s1281 + $0xc] sm:$0xf]
    %v1286 = vld [vmem:[%s1281 + $0x10] sm:$0xf]
    %v1287 = vld [vmem:[%s1281 + $0x14] sm:$0xf]
    %v1288 = vld [vmem:[%s1281 + $0x18] sm:$0xf]
    %v1289 = vld [vmem:[%s1281 + $0x1c] sm:$0xf]
    %v1290 = vld [vmem:[%s1281 + $0x20] sm:$0xf]
    %v1291 = vld [vmem:[%s1281 + $0x24] sm:$0xf]
    %v1292 = vld [vmem:[%s1281 + $0x28] sm:$0xf]
    %v1293 = vld [vmem:[%s1281 + $0x2c] sm:$0xf]
    %v1294 = vld [vmem:[%s1281 + $0x30] sm:$0xf]
    %v1295 = vld [vmem:[%s1281 + $0x34] sm:$0xf]
    %v1296 = vld [vmem:[%s1281 + $0x38] sm:$0xf]
    %v1297 = vld [vmem:[%s1281 + $0x3c] sm:$0xf]
    %v1298 = vld [vmem:[%s4 + $0x4] sm:$0x1]
    %v1299 = vlaneseq
    %v1300 = vshrl.u32 %v1299, 7
    %v1301 = vsub.s32 0, %v1300
    %v1302 = vrot.slane %v1298, %v1301
    %v1319 = vunpack.c.l.b16 %v1282
    %v1320 = vunpack.c.l.b16 %v1283
    %v1321 = vunpack.c.l.b16 %v1284
    %v1322 = vunpack.c.l.b16 %v1285
    %v1323 = vunpack.c.l.b16 %v1286
    %v1324 = vunpack.c.l.b16 %v1287
    %v1325 = vunpack.c.l.b16 %v1288
    %v1326 = vunpack.c.l.b16 %v1289
    %v1327 = vunpack.c.l.b16 %v1290
    %v1328 = vunpack.c.l.b16 %v1291
    %v1329 = vunpack.c.l.b16 %v1292
    %v1330 = vunpack.c.l.b16 %v1293
    %v1331 = vunpack.c.l.b16 %v1294
    %v1332 = vunpack.c.l.b16 %v1295
    %v1333 = vunpack.c.l.b16 %v1296
    %v1334 = vunpack.c.l.b16 %v1297
    %v1335 = vpack.c.b16 %v1320, %v1319
    %v1336 = vpack.c.b16 %v1322, %v1321
    %v1337 = vpack.c.b16 %v1324, %v1323
    %v1338 = vpack.c.b16 %v1326, %v1325
    %v1339 = vpack.c.b16 %v1328, %v1327
    %v1340 = vpack.c.b16 %v1330, %v1329
    %v1341 = vpack.c.b16 %v1332, %v1331
    %v1342 = vpack.c.b16 %v1334, %v1333
    %1351 = vmatprep.subr.bf16.mxu0 0
    %1352 = vmatpush1.bf16.msra.mxu0 %v1335
    %1353 = vmatprep.subr.bf16.mxu0 0
    %1354 = vmatpush1.bf16.msra.mxu0 %v1336
    %1355 = vmatprep.subr.bf16.mxu0 0
    %1356 = vmatpush1.bf16.msra.mxu0 %v1337
    %1357 = vmatprep.subr.bf16.mxu0 0
    %1358 = vmatpush1.bf16.msra.mxu0 %v1338
    %1359 = vmatprep.subr.bf16.mxu0 0
    %1360 = vmatpush1.bf16.msra.mxu0 %v1339
    %1361 = vmatprep.subr.bf16.mxu0 0
    %1362 = vmatpush1.bf16.msra.mxu0 %v1340
    %1363 = vmatprep.subr.bf16.mxu0 0
    %1364 = vmatpush1.bf16.msra.mxu0 %v1341
    %1365 = vmatprep.subr.bf16.mxu0 0
    %1366 = vmatpush1.bf16.msra.mxu0 %v1342
    %1367 = vmatprep.subr.bf16.mxu0 0
    %1368 = vmatpush1.bf16.msra.mxu0 0
    %1369 = vmatprep.subr.bf16.mxu0 0
    %1370 = vmatpush1.bf16.msra.mxu0 0
    %1371 = vmatprep.subr.bf16.mxu0 0
    %1372 = vmatpush1.bf16.msra.mxu0 0
    %1373 = vmatprep.subr.bf16.mxu0 0
    %1374 = vmatpush1.bf16.msra.mxu0 0
    %1375 = vmatprep.subr.bf16.mxu0 0
    %1376 = vmatpush1.bf16.msra.mxu0 0
    %1377 = vmatprep.subr.bf16.mxu0 0
    %1378 = vmatpush1.bf16.msra.mxu0 0
    %1379 = vmatprep.subr.bf16.mxu0 0
    %1380 = vmatpush1.bf16.msra.mxu0 0
    %1381 = vmatprep.subr.bf16.mxu0 0
    %1382 = vmatpush1.bf16.msra.mxu0 0
    %1383 = vmatprep.mubr.bf16.mxu0 0
    %1384 = vmatmul.mubr.bf16.gmra.mrb[0].mxu0 %v1265
    %v1385 = vpop.f32.mrb[0].mxu0
    %v1386 = vadd.f32 %v1302, %v1385
    %v1387 = vpop.f32.mrb[0].mxu0
    %v1388 = vpop.f32.mrb[0].mxu0
    %v1389 = vadd.f32 %v1302, %v1388
    %v1390 = vpop.f32.mrb[0].mxu0
    %1391 = vmatprep.mubr.bf16.mxu0 0
    %1392 = vmatmul.mubr.bf16.gmra.mrb[0].mxu0 %v1266
    %v1393 = vpop.f32.mrb[0].mxu0
    %v1394 = vadd.f32 %v1302, %v1393
    %v1395 = vpop.f32.mrb[0].mxu0
    %v1396 = vpop.f32.mrb[0].mxu0
    %v1397 = vadd.f32 %v1302, %v1396
    %v1398 = vpop.f32.mrb[0].mxu0
    %1399 = vmatprep.mubr.bf16.mxu0 0
    %1400 = vmatmul.mubr.bf16.gmra.mrb[0].mxu0 %v1267
    %v1401 = vpop.f32.mrb[0].mxu0
    %v1402 = vadd.f32 %v1302, %v1401
    %v1403 = vpop.f32.mrb[0].mxu0
    %v1404 = vpop.f32.mrb[0].mxu0
    %v1405 = vadd.f32 %v1302, %v1404
    %v1406 = vpop.f32.mrb[0].mxu0
    %1407 = vmatprep.mubr.bf16.mxu0 0
    %1408 = vmatmul.mubr.bf16.gmra.mrb[0].mxu0 %v1268
    %v1409 = vpop.f32.mrb[0].mxu0
    %v1410 = vadd.f32 %v1302, %v1409
    %v1411 = vpop.f32.mrb[0].mxu0
    %v1412 = vpop.f32.mrb[0].mxu0
    %v1413 = vadd.f32 %v1302, %v1412
    %v1414 = vpop.f32.mrb[0].mxu0
    %1415 = vmatprep.mubr.bf16.mxu0 0
    %1416 = vmatmul.mubr.bf16.gmra.mrb[0].mxu0 %v1269
    %v1417 = vpop.f32.mrb[0].mxu0
    %v1418 = vadd.f32 %v1302, %v1417
    %v1419 = vpop.f32.mrb[0].mxu0
    %v1420 = vpop.f32.mrb[0].mxu0
    %v1421 = vadd.f32 %v1302, %v1420
    %v1422 = vpop.f32.mrb[0].mxu0
    %1423 = vmatprep.mubr.bf16.mxu0 0
    %1424 = vmatmul.mubr.bf16.gmra.mrb[0].mxu0 %v1270
    %v1425 = vpop.f32.mrb[0].mxu0
    %v1426 = vadd.f32 %v1302, %v1425
    %v1427 = vpop.f32.mrb[0].mxu0
    %v1428 = vpop.f32.mrb[0].mxu0
    %v1429 = vadd.f32 %v1302, %v1428
    %v1430 = vpop.f32.mrb[0].mxu0
    %1431 = vmatprep.mubr.bf16.mxu0 0
    %1432 = vmatmul.mubr.bf16.gmra.mrb[0].mxu0 %v1271
    %v1433 = vpop.f32.mrb[0].mxu0
    %v1434 = vadd.f32 %v1302, %v1433
    %v1435 = vpop.f32.mrb[0].mxu0
    %v1436 = vpop.f32.mrb[0].mxu0
    %v1437 = vadd.f32 %v1302, %v1436
    %v1438 = vpop.f32.mrb[0].mxu0
    %1439 = vmatprep.mubr.bf16.mxu0 0
    %1440 = vmatmul.mubr.bf16.gmra.mrb[0].mxu0 %v1272
    %v1441 = vpop.f32.mrb[0].mxu0
    %v1442 = vadd.f32 %v1302, %v1441
    %v1443 = vpop.f32.mrb[0].mxu0
    %v1444 = vpop.f32.mrb[0].mxu0
    %v1445 = vadd.f32 %v1302, %v1444
    %v1446 = vpop.f32.mrb[0].mxu0
    %1447 = vmatprep.mubr.bf16.mxu0 0
    %1448 = vmatmul.mubr.bf16.gmra.mrb[0].mxu0 %v1273
    %v1449 = vpop.f32.mrb[0].mxu0
    %v1450 = vadd.f32 %v1302, %v1449
    %v1451 = vpop.f32.mrb[0].mxu0
    %v1452 = vpop.f32.mrb[0].mxu0
    %v1453 = vadd.f32 %v1302, %v1452
    %v1454 = vpop.f32.mrb[0].mxu0
    %1455 = vmatprep.mubr.bf16.mxu0 0
    %1456 = vmatmul.mubr.bf16.gmra.mrb[0].mxu0 %v1274
    %v1457 = vpop.f32.mrb[0].mxu0
    %v1458 = vadd.f32 %v1302, %v1457
    %v1459 = vpop.f32.mrb[0].mxu0
    %v1460 = vpop.f32.mrb[0].mxu0
    %v1461 = vadd.f32 %v1302, %v1460
    %v1462 = vpop.f32.mrb[0].mxu0
    %1463 = vmatprep.mubr.bf16.mxu0 0
    %1464 = vmatmul.mubr.bf16.gmra.mrb[0].mxu0 %v1275
    %v1465 = vpop.f32.mrb[0].mxu0
    %v1466 = vadd.f32 %v1302, %v1465
    %v1467 = vpop.f32.mrb[0].mxu0
    %v1468 = vpop.f32.mrb[0].mxu0
    %v1469 = vadd.f32 %v1302, %v1468
    %v1470 = vpop.f32.mrb[0].mxu0
    %1471 = vmatprep.mubr.bf16.mxu0 0
    %1472 = vmatmul.mubr.bf16.gmra.mrb[0].mxu0 %v1276
    %v1473 = vpop.f32.mrb[0].mxu0
    %v1474 = vadd.f32 %v1302, %v1473
    %v1475 = vpop.f32.mrb[0].mxu0
    %v1476 = vpop.f32.mrb[0].mxu0
    %v1477 = vadd.f32 %v1302, %v1476
    %v1478 = vpop.f32.mrb[0].mxu0
    %1479 = vmatprep.mubr.bf16.mxu0 0
    %1480 = vmatmul.mubr.bf16.gmra.mrb[0].mxu0 %v1277
    %v1481 = vpop.f32.mrb[0].mxu0
    %v1482 = vadd.f32 %v1302, %v1481
    %v1483 = vpop.f32.mrb[0].mxu0
    %v1484 = vpop.f32.mrb[0].mxu0
    %v1485 = vadd.f32 %v1302, %v1484
    %v1486 = vpop.f32.mrb[0].mxu0
    %1487 = vmatprep.mubr.bf16.mxu0 0
    %1488 = vmatmul.mubr.bf16.gmra.mrb[0].mxu0 %v1278
    %v1489 = vpop.f32.mrb[0].mxu0
    %v1490 = vadd.f32 %v1302, %v1489
    %v1491 = vpop.f32.mrb[0].mxu0
    %v1492 = vpop.f32.mrb[0].mxu0
    %v1493 = vadd.f32 %v1302, %v1492
    %v1494 = vpop.f32.mrb[0].mxu0
    %1495 = vmatprep.mubr.bf16.mxu0 0
    %1496 = vmatmul.mubr.bf16.gmra.mrb[0].mxu0 %v1279
    %v1497 = vpop.f32.mrb[0].mxu0
    %v1498 = vadd.f32 %v1302, %v1497
    %v1499 = vpop.f32.mrb[0].mxu0
    %v1500 = vpop.f32.mrb[0].mxu0
    %v1501 = vadd.f32 %v1302, %v1500
    %v1502 = vpop.f32.mrb[0].mxu0
    %1503 = vmatprep.mubr.bf16.mxu0 0
    %1504 = vmatmul.mubr.bf16.gmra.mrb[0].mxu0 %v1280
    %v1505 = vpop.f32.mrb[0].mxu0
    %v1506 = vadd.f32 %v1302, %v1505
    %v1507 = vpop.f32.mrb[0].mxu0
    %v1508 = vpop.f32.mrb[0].mxu0
    %v1509 = vadd.f32 %v1302, %v1508
    %v1510 = vpop.f32.mrb[0].mxu0
    %1511 = vdwg.mxu0
    %v1512 = vmax.f32 %v1386, 0.0
    %v1513 = vmax.f32 %v1389, 0.0
    %v1514 = vmax.f32 %v1394, 0.0
    %v1515 = vmax.f32 %v1397, 0.0
    %v1516 = vmax.f32 %v1402, 0.0
    %v1517 = vmax.f32 %v1405, 0.0
    %v1518 = vmax.f32 %v1410, 0.0
    %v1519 = vmax.f32 %v1413, 0.0
    %v1520 = vmax.f32 %v1418, 0.0
    %v1521 = vmax.f32 %v1421, 0.0
    %v1522 = vmax.f32 %v1426, 0.0
    %v1523 = vmax.f32 %v1429, 0.0
    %v1524 = vmax.f32 %v1434, 0.0
    %v1525 = vmax.f32 %v1437, 0.0
    %v1526 = vmax.f32 %v1442, 0.0
    %v1527 = vmax.f32 %v1445, 0.0
    %v1528 = vmax.f32 %v1450, 0.0
    %v1529 = vmax.f32 %v1453, 0.0
    %v1530 = vmax.f32 %v1458, 0.0
    %v1531 = vmax.f32 %v1461, 0.0
    %v1532 = vmax.f32 %v1466, 0.0
    %v1533 = vmax.f32 %v1469, 0.0
    %v1534 = vmax.f32 %v1474, 0.0
    %v1535 = vmax.f32 %v1477, 0.0
    %v1536 = vmax.f32 %v1482, 0.0
    %v1537 = vmax.f32 %v1485, 0.0
    %v1538 = vmax.f32 %v1490, 0.0
    %v1539 = vmax.f32 %v1493, 0.0
    %v1540 = vmax.f32 %v1498, 0.0
    %v1541 = vmax.f32 %v1501, 0.0
    %v1542 = vmax.f32 %v1506, 0.0
    %v1543 = vmax.f32 %v1509, 0.0
    %v1544 = vpack.c.bf16 %v1513, %v1512
    %v1545 = vpack.c.bf16 %v1515, %v1514
    %v1546 = vpack.c.bf16 %v1517, %v1516
    %v1547 = vpack.c.bf16 %v1519, %v1518
    %v1548 = vpack.c.bf16 %v1521, %v1520
    %v1549 = vpack.c.bf16 %v1523, %v1522
    %v1550 = vpack.c.bf16 %v1525, %v1524
    %v1551 = vpack.c.bf16 %v1527, %v1526
    %v1552 = vpack.c.bf16 %v1529, %v1528
    %v1553 = vpack.c.bf16 %v1531, %v1530
    %v1554 = vpack.c.bf16 %v1533, %v1532
    %v1555 = vpack.c.bf16 %v1535, %v1534
    %v1556 = vpack.c.bf16 %v1537, %v1536
    %v1557 = vpack.c.bf16 %v1539, %v1538
    %v1558 = vpack.c.bf16 %v1541, %v1540
    %v1559 = vpack.c.bf16 %v1543, %v1542
    %s1560 = scalar_lea.vmem [#allocation2], 256
    %v1561 = vld [vmem:[%s1560] sm:$0xf]
    %v1562 = vld [vmem:[%s1560 + $0x4] sm:$0xf]
    %v1563 = vld [vmem:[%s1560 + $0x8] sm:$0xf]
    %v1564 = vld [vmem:[%s1560 + $0xc] sm:$0xf]
    %v1565 = vld [vmem:[%s1560 + $0x10] sm:$0xf]
    %v1566 = vld [vmem:[%s1560 + $0x14] sm:$0xf]
    %v1567 = vld [vmem:[%s1560 + $0x18] sm:$0xf]
    %v1568 = vld [vmem:[%s1560 + $0x1c] sm:$0xf]
    %v1569 = vld [vmem:[%s1560 + $0x20] sm:$0xf]
    %v1570 = vld [vmem:[%s1560 + $0x24] sm:$0xf]
    %v1571 = vld [vmem:[%s1560 + $0x28] sm:$0xf]
    %v1572 = vld [vmem:[%s1560 + $0x2c] sm:$0xf]
    %v1573 = vld [vmem:[%s1560 + $0x30] sm:$0xf]
    %v1574 = vld [vmem:[%s1560 + $0x34] sm:$0xf]
    %v1575 = vld [vmem:[%s1560 + $0x38] sm:$0xf]
    %v1576 = vld [vmem:[%s1560 + $0x3c] sm:$0xf]
    %v1577 = vld [vmem:[%s4 + $0x5] sm:$0x1]
    %v1578 = vlaneseq
    %v1579 = vshrl.u32 %v1578, 7
    %v1580 = vsub.s32 0, %v1579
    %v1581 = vrot.slane %v1577, %v1580
    %v1598 = vunpack.c.l.b16 %v1561
    %v1599 = vunpack.c.l.b16 %v1562
    %v1600 = vunpack.c.l.b16 %v1563
    %v1601 = vunpack.c.l.b16 %v1564
    %v1602 = vunpack.c.l.b16 %v1565
    %v1603 = vunpack.c.l.b16 %v1566
    %v1604 = vunpack.c.l.b16 %v1567
    %v1605 = vunpack.c.l.b16 %v1568
    %v1606 = vunpack.c.l.b16 %v1569
    %v1607 = vunpack.c.l.b16 %v1570
    %v1608 = vunpack.c.l.b16 %v1571
    %v1609 = vunpack.c.l.b16 %v1572
    %v1610 = vunpack.c.l.b16 %v1573
    %v1611 = vunpack.c.l.b16 %v1574
    %v1612 = vunpack.c.l.b16 %v1575
    %v1613 = vunpack.c.l.b16 %v1576
    %v1614 = vpack.c.b16 %v1599, %v1598
    %v1615 = vpack.c.b16 %v1601, %v1600
    %v1616 = vpack.c.b16 %v1603, %v1602
    %v1617 = vpack.c.b16 %v1605, %v1604
    %v1618 = vpack.c.b16 %v1607, %v1606
    %v1619 = vpack.c.b16 %v1609, %v1608
    %v1620 = vpack.c.b16 %v1611, %v1610
    %v1621 = vpack.c.b16 %v1613, %v1612
    %1630 = vmatprep.subr.bf16.mxu0 0
    %1631 = vmatpush1.bf16.msra.mxu0 %v1614
    %1632 = vmatprep.subr.bf16.mxu0 0
    %1633 = vmatpush1.bf16.msra.mxu0 %v1615
    %1634 = vmatprep.subr.bf16.mxu0 0
    %1635 = vmatpush1.bf16.msra.mxu0 %v1616
    %1636 = vmatprep.subr.bf16.mxu0 0
    %1637 = vmatpush1.bf16.msra.mxu0 %v1617
    %1638 = vmatprep.subr.bf16.mxu0 0
    %1639 = vmatpush1.bf16.msra.mxu0 %v1618
    %1640 = vmatprep.subr.bf16.mxu0 0
    %1641 = vmatpush1.bf16.msra.mxu0 %v1619
    %1642 = vmatprep.subr.bf16.mxu0 0
    %1643 = vmatpush1.bf16.msra.mxu0 %v1620
    %1644 = vmatprep.subr.bf16.mxu0 0
    %1645 = vmatpush1.bf16.msra.mxu0 %v1621
    %1646 = vmatprep.subr.bf16.mxu0 0
    %1647 = vmatpush1.bf16.msra.mxu0 0
    %1648 = vmatprep.subr.bf16.mxu0 0
    %1649 = vmatpush1.bf16.msra.mxu0 0
    %1650 = vmatprep.subr.bf16.mxu0 0
    %1651 = vmatpush1.bf16.msra.mxu0 0
    %1652 = vmatprep.subr.bf16.mxu0 0
    %1653 = vmatpush1.bf16.msra.mxu0 0
    %1654 = vmatprep.subr.bf16.mxu0 0
    %1655 = vmatpush1.bf16.msra.mxu0 0
    %1656 = vmatprep.subr.bf16.mxu0 0
    %1657 = vmatpush1.bf16.msra.mxu0 0
    %1658 = vmatprep.subr.bf16.mxu0 0
    %1659 = vmatpush1.bf16.msra.mxu0 0
    %1660 = vmatprep.subr.bf16.mxu0 0
    %1661 = vmatpush1.bf16.msra.mxu0 0
    %1662 = vmatprep.mubr.bf16.mxu0 0
    %1663 = vmatmul.mubr.bf16.gmra.mrb[0].mxu0 %v1544
    %v1664 = vpop.f32.mrb[0].mxu0
    %v1665 = vadd.f32 %v1581, %v1664
    %v1666 = vpop.f32.mrb[0].mxu0
    %v1667 = vpop.f32.mrb[0].mxu0
    %v1668 = vadd.f32 %v1581, %v1667
    %v1669 = vpop.f32.mrb[0].mxu0
    %1670 = vmatprep.mubr.bf16.mxu0 0
    %1671 = vmatmul.mubr.bf16.gmra.mrb[0].mxu0 %v1545
    %v1672 = vpop.f32.mrb[0].mxu0
    %v1673 = vadd.f32 %v1581, %v1672
    %v1674 = vpop.f32.mrb[0].mxu0
    %v1675 = vpop.f32.mrb[0].mxu0
    %v1676 = vadd.f32 %v1581, %v1675
    %v1677 = vpop.f32.mrb[0].mxu0
    %1678 = vmatprep.mubr.bf16.mxu0 0
    %1679 = vmatmul.mubr.bf16.gmra.mrb[0].mxu0 %v1546
    %v1680 = vpop.f32.mrb[0].mxu0
    %v1681 = vadd.f32 %v1581, %v1680
    %v1682 = vpop.f32.mrb[0].mxu0
    %v1683 = vpop.f32.mrb[0].mxu0
    %v1684 = vadd.f32 %v1581, %v1683
    %v1685 = vpop.f32.mrb[0].mxu0
    %1686 = vmatprep.mubr.bf16.mxu0 0
    %1687 = vmatmul.mubr.bf16.gmra.mrb[0].mxu0 %v1547
    %v1688 = vpop.f32.mrb[0].mxu0
    %v1689 = vadd.f32 %v1581, %v1688
    %v1690 = vpop.f32.mrb[0].mxu0
    %v1691 = vpop.f32.mrb[0].mxu0
    %v1692 = vadd.f32 %v1581, %v1691
    %v1693 = vpop.f32.mrb[0].mxu0
    %1694 = vmatprep.mubr.bf16.mxu0 0
    %1695 = vmatmul.mubr.bf16.gmra.mrb[0].mxu0 %v1548
    %v1696 = vpop.f32.mrb[0].mxu0
    %v1697 = vadd.f32 %v1581, %v1696
    %v1698 = vpop.f32.mrb[0].mxu0
    %v1699 = vpop.f32.mrb[0].mxu0
    %v1700 = vadd.f32 %v1581, %v1699
    %v1701 = vpop.f32.mrb[0].mxu0
    %1702 = vmatprep.mubr.bf16.mxu0 0
    %1703 = vmatmul.mubr.bf16.gmra.mrb[0].mxu0 %v1549
    %v1704 = vpop.f32.mrb[0].mxu0
    %v1705 = vadd.f32 %v1581, %v1704
    %v1706 = vpop.f32.mrb[0].mxu0
    %v1707 = vpop.f32.mrb[0].mxu0
    %v1708 = vadd.f32 %v1581, %v1707
    %v1709 = vpop.f32.mrb[0].mxu0
    %1710 = vmatprep.mubr.bf16.mxu0 0
    %1711 = vmatmul.mubr.bf16.gmra.mrb[0].mxu0 %v1550
    %v1712 = vpop.f32.mrb[0].mxu0
    %v1713 = vadd.f32 %v1581, %v1712
    %v1714 = vpop.f32.mrb[0].mxu0
    %v1715 = vpop.f32.mrb[0].mxu0
    %v1716 = vadd.f32 %v1581, %v1715
    %v1717 = vpop.f32.mrb[0].mxu0
    %1718 = vmatprep.mubr.bf16.mxu0 0
    %1719 = vmatmul.mubr.bf16.gmra.mrb[0].mxu0 %v1551
    %v1720 = vpop.f32.mrb[0].mxu0
    %v1721 = vadd.f32 %v1581, %v1720
    %v1722 = vpop.f32.mrb[0].mxu0
    %v1723 = vpop.f32.mrb[0].mxu0
    %v1724 = vadd.f32 %v1581, %v1723
    %v1725 = vpop.f32.mrb[0].mxu0
    %1726 = vmatprep.mubr.bf16.mxu0 0
    %1727 = vmatmul.mubr.bf16.gmra.mrb[0].mxu0 %v1552
    %v1728 = vpop.f32.mrb[0].mxu0
    %v1729 = vadd.f32 %v1581, %v1728
    %v1730 = vpop.f32.mrb[0].mxu0
    %v1731 = vpop.f32.mrb[0].mxu0
    %v1732 = vadd.f32 %v1581, %v1731
    %v1733 = vpop.f32.mrb[0].mxu0
    %1734 = vmatprep.mubr.bf16.mxu0 0
    %1735 = vmatmul.mubr.bf16.gmra.mrb[0].mxu0 %v1553
    %v1736 = vpop.f32.mrb[0].mxu0
    %v1737 = vadd.f32 %v1581, %v1736
    %v1738 = vpop.f32.mrb[0].mxu0
    %v1739 = vpop.f32.mrb[0].mxu0
    %v1740 = vadd.f32 %v1581, %v1739
    %v1741 = vpop.f32.mrb[0].mxu0
    %1742 = vmatprep.mubr.bf16.mxu0 0
    %1743 = vmatmul.mubr.bf16.gmra.mrb[0].mxu0 %v1554
    %v1744 = vpop.f32.mrb[0].mxu0
    %v1745 = vadd.f32 %v1581, %v1744
    %v1746 = vpop.f32.mrb[0].mxu0
    %v1747 = vpop.f32.mrb[0].mxu0
    %v1748 = vadd.f32 %v1581, %v1747
    %v1749 = vpop.f32.mrb[0].mxu0
    %1750 = vmatprep.mubr.bf16.mxu0 0
    %1751 = vmatmul.mubr.bf16.gmra.mrb[0].mxu0 %v1555
    %v1752 = vpop.f32.mrb[0].mxu0
    %v1753 = vadd.f32 %v1581, %v1752
    %v1754 = vpop.f32.mrb[0].mxu0
    %v1755 = vpop.f32.mrb[0].mxu0
    %v1756 = vadd.f32 %v1581, %v1755
    %v1757 = vpop.f32.mrb[0].mxu0
    %1758 = vmatprep.mubr.bf16.mxu0 0
    %1759 = vmatmul.mubr.bf16.gmra.mrb[0].mxu0 %v1556
    %v1760 = vpop.f32.mrb[0].mxu0
    %v1761 = vadd.f32 %v1581, %v1760
    %v1762 = vpop.f32.mrb[0].mxu0
    %v1763 = vpop.f32.mrb[0].mxu0
    %v1764 = vadd.f32 %v1581, %v1763
    %v1765 = vpop.f32.mrb[0].mxu0
    %1766 = vmatprep.mubr.bf16.mxu0 0
    %1767 = vmatmul.mubr.bf16.gmra.mrb[0].mxu0 %v1557
    %v1768 = vpop.f32.mrb[0].mxu0
    %v1769 = vadd.f32 %v1581, %v1768
    %v1770 = vpop.f32.mrb[0].mxu0
    %v1771 = vpop.f32.mrb[0].mxu0
    %v1772 = vadd.f32 %v1581, %v1771
    %v1773 = vpop.f32.mrb[0].mxu0
    %1774 = vmatprep.mubr.bf16.mxu0 0
    %1775 = vmatmul.mubr.bf16.gmra.mrb[0].mxu0 %v1558
    %v1776 = vpop.f32.mrb[0].mxu0
    %v1777 = vadd.f32 %v1581, %v1776
    %v1778 = vpop.f32.mrb[0].mxu0
    %v1779 = vpop.f32.mrb[0].mxu0
    %v1780 = vadd.f32 %v1581, %v1779
    %v1781 = vpop.f32.mrb[0].mxu0
    %1782 = vmatprep.mubr.bf16.mxu0 0
    %1783 = vmatmul.mubr.bf16.gmra.mrb[0].mxu0 %v1559
    %v1784 = vpop.f32.mrb[0].mxu0
    %v1785 = vadd.f32 %v1581, %v1784
    %v1786 = vpop.f32.mrb[0].mxu0
    %v1787 = vpop.f32.mrb[0].mxu0
    %v1788 = vadd.f32 %v1581, %v1787
    %v1789 = vpop.f32.mrb[0].mxu0
    %1790 = vdwg.mxu0
    %v1791 = vmax.f32 %v1665, 0.0
    %v1792 = vmax.f32 %v1668, 0.0
    %v1793 = vmax.f32 %v1673, 0.0
    %v1794 = vmax.f32 %v1676, 0.0
    %v1795 = vmax.f32 %v1681, 0.0
    %v1796 = vmax.f32 %v1684, 0.0
    %v1797 = vmax.f32 %v1689, 0.0
    %v1798 = vmax.f32 %v1692, 0.0
    %v1799 = vmax.f32 %v1697, 0.0
    %v1800 = vmax.f32 %v1700, 0.0
    %v1801 = vmax.f32 %v1705, 0.0
    %v1802 = vmax.f32 %v1708, 0.0
    %v1803 = vmax.f32 %v1713, 0.0
    %v1804 = vmax.f32 %v1716, 0.0
    %v1805 = vmax.f32 %v1721, 0.0
    %v1806 = vmax.f32 %v1724, 0.0
    %v1807 = vmax.f32 %v1729, 0.0
    %v1808 = vmax.f32 %v1732, 0.0
    %v1809 = vmax.f32 %v1737, 0.0
    %v1810 = vmax.f32 %v1740, 0.0
    %v1811 = vmax.f32 %v1745, 0.0
    %v1812 = vmax.f32 %v1748, 0.0
    %v1813 = vmax.f32 %v1753, 0.0
    %v1814 = vmax.f32 %v1756, 0.0
    %v1815 = vmax.f32 %v1761, 0.0
    %v1816 = vmax.f32 %v1764, 0.0
    %v1817 = vmax.f32 %v1769, 0.0
    %v1818 = vmax.f32 %v1772, 0.0
    %v1819 = vmax.f32 %v1777, 0.0
    %v1820 = vmax.f32 %v1780, 0.0
    %v1821 = vmax.f32 %v1785, 0.0
    %v1822 = vmax.f32 %v1788, 0.0
    %v1823 = vpack.c.bf16 %v1792, %v1791
    %v1824 = vpack.c.bf16 %v1794, %v1793
    %v1825 = vpack.c.bf16 %v1796, %v1795
    %v1826 = vpack.c.bf16 %v1798, %v1797
    %v1827 = vpack.c.bf16 %v1800, %v1799
    %v1828 = vpack.c.bf16 %v1802, %v1801
    %v1829 = vpack.c.bf16 %v1804, %v1803
    %v1830 = vpack.c.bf16 %v1806, %v1805
    %v1831 = vpack.c.bf16 %v1808, %v1807
    %v1832 = vpack.c.bf16 %v1810, %v1809
    %v1833 = vpack.c.bf16 %v1812, %v1811
    %v1834 = vpack.c.bf16 %v1814, %v1813
    %v1835 = vpack.c.bf16 %v1816, %v1815
    %v1836 = vpack.c.bf16 %v1818, %v1817
    %v1837 = vpack.c.bf16 %v1820, %v1819
    %v1838 = vpack.c.bf16 %v1822, %v1821
    %s1839 = scalar_lea.vmem [#allocation2], 320
    %v1840 = vld [vmem:[%s1839] sm:$0xf]
    %v1841 = vld [vmem:[%s1839 + $0x4] sm:$0xf]
    %v1842 = vld [vmem:[%s1839 + $0x8] sm:$0xf]
    %v1843 = vld [vmem:[%s1839 + $0xc] sm:$0xf]
    %v1844 = vld [vmem:[%s1839 + $0x10] sm:$0xf]
    %v1845 = vld [vmem:[%s1839 + $0x14] sm:$0xf]
    %v1846 = vld [vmem:[%s1839 + $0x18] sm:$0xf]
    %v1847 = vld [vmem:[%s1839 + $0x1c] sm:$0xf]
    %v1848 = vld [vmem:[%s1839 + $0x20] sm:$0xf]
    %v1849 = vld [vmem:[%s1839 + $0x24] sm:$0xf]
    %v1850 = vld [vmem:[%s1839 + $0x28] sm:$0xf]
    %v1851 = vld [vmem:[%s1839 + $0x2c] sm:$0xf]
    %v1852 = vld [vmem:[%s1839 + $0x30] sm:$0xf]
    %v1853 = vld [vmem:[%s1839 + $0x34] sm:$0xf]
    %v1854 = vld [vmem:[%s1839 + $0x38] sm:$0xf]
    %v1855 = vld [vmem:[%s1839 + $0x3c] sm:$0xf]
    %v1856 = vld [vmem:[%s4 + $0x6] sm:$0x1]
    %v1857 = vlaneseq
    %v1858 = vshrl.u32 %v1857, 7
    %v1859 = vsub.s32 0, %v1858
    %v1860 = vrot.slane %v1856, %v1859
    %v1877 = vunpack.c.l.b16 %v1840
    %v1878 = vunpack.c.l.b16 %v1841
    %v1879 = vunpack.c.l.b16 %v1842
    %v1880 = vunpack.c.l.b16 %v1843
    %v1881 = vunpack.c.l.b16 %v1844
    %v1882 = vunpack.c.l.b16 %v1845
    %v1883 = vunpack.c.l.b16 %v1846
    %v1884 = vunpack.c.l.b16 %v1847
    %v1885 = vunpack.c.l.b16 %v1848
    %v1886 = vunpack.c.l.b16 %v1849
    %v1887 = vunpack.c.l.b16 %v1850
    %v1888 = vunpack.c.l.b16 %v1851
    %v1889 = vunpack.c.l.b16 %v1852
    %v1890 = vunpack.c.l.b16 %v1853
    %v1891 = vunpack.c.l.b16 %v1854
    %v1892 = vunpack.c.l.b16 %v1855
    %v1893 = vpack.c.b16 %v1878, %v1877
    %v1894 = vpack.c.b16 %v1880, %v1879
    %v1895 = vpack.c.b16 %v1882, %v1881
    %v1896 = vpack.c.b16 %v1884, %v1883
    %v1897 = vpack.c.b16 %v1886, %v1885
    %v1898 = vpack.c.b16 %v1888, %v1887
    %v1899 = vpack.c.b16 %v1890, %v1889
    %v1900 = vpack.c.b16 %v1892, %v1891
    %1909 = vmatprep.subr.bf16.mxu0 0
    %1910 = vmatpush1.bf16.msra.mxu0 %v1893
    %1911 = vmatprep.subr.bf16.mxu0 0
    %1912 = vmatpush1.bf16.msra.mxu0 %v1894
    %1913 = vmatprep.subr.bf16.mxu0 0
    %1914 = vmatpush1.bf16.msra.mxu0 %v1895
    %1915 = vmatprep.subr.bf16.mxu0 0
    %1916 = vmatpush1.bf16.msra.mxu0 %v1896
    %1917 = vmatprep.subr.bf16.mxu0 0
    %1918 = vmatpush1.bf16.msra.mxu0 %v1897
    %1919 = vmatprep.subr.bf16.mxu0 0
    %1920 = vmatpush1.bf16.msra.mxu0 %v1898
    %1921 = vmatprep.subr.bf16.mxu0 0
    %1922 = vmatpush1.bf16.msra.mxu0 %v1899
    %1923 = vmatprep.subr.bf16.mxu0 0
    %1924 = vmatpush1.bf16.msra.mxu0 %v1900
    %1925 = vmatprep.subr.bf16.mxu0 0
    %1926 = vmatpush1.bf16.msra.mxu0 0
    %1927 = vmatprep.subr.bf16.mxu0 0
    %1928 = vmatpush1.bf16.msra.mxu0 0
    %1929 = vmatprep.subr.bf16.mxu0 0
    %1930 = vmatpush1.bf16.msra.mxu0 0
    %1931 = vmatprep.subr.bf16.mxu0 0
    %1932 = vmatpush1.bf16.msra.mxu0 0
    %1933 = vmatprep.subr.bf16.mxu0 0
    %1934 = vmatpush1.bf16.msra.mxu0 0
    %1935 = vmatprep.subr.bf16.mxu0 0
    %1936 = vmatpush1.bf16.msra.mxu0 0
    %1937 = vmatprep.subr.bf16.mxu0 0
    %1938 = vmatpush1.bf16.msra.mxu0 0
    %1939 = vmatprep.subr.bf16.mxu0 0
    %1940 = vmatpush1.bf16.msra.mxu0 0
    %1941 = vmatprep.mubr.bf16.mxu0 0
    %1942 = vmatmul.mubr.bf16.gmra.mrb[0].mxu0 %v1823
    %v1943 = vpop.f32.mrb[0].mxu0
    %v1944 = vadd.f32 %v1860, %v1943
    %v1945 = vpop.f32.mrb[0].mxu0
    %v1946 = vpop.f32.mrb[0].mxu0
    %v1947 = vadd.f32 %v1860, %v1946
    %v1948 = vpop.f32.mrb[0].mxu0
    %1949 = vmatprep.mubr.bf16.mxu0 0
    %1950 = vmatmul.mubr.bf16.gmra.mrb[0].mxu0 %v1824
    %v1951 = vpop.f32.mrb[0].mxu0
    %v1952 = vadd.f32 %v1860, %v1951
    %v1953 = vpop.f32.mrb[0].mxu0
    %v1954 = vpop.f32.mrb[0].mxu0
    %v1955 = vadd.f32 %v1860, %v1954
    %v1956 = vpop.f32.mrb[0].mxu0
    %1957 = vmatprep.mubr.bf16.mxu0 0
    %1958 = vmatmul.mubr.bf16.gmra.mrb[0].mxu0 %v1825
    %v1959 = vpop.f32.mrb[0].mxu0
    %v1960 = vadd.f32 %v1860, %v1959
    %v1961 = vpop.f32.mrb[0].mxu0
    %v1962 = vpop.f32.mrb[0].mxu0
    %v1963 = vadd.f32 %v1860, %v1962
    %v1964 = vpop.f32.mrb[0].mxu0
    %1965 = vmatprep.mubr.bf16.mxu0 0
    %1966 = vmatmul.mubr.bf16.gmra.mrb[0].mxu0 %v1826
    %v1967 = vpop.f32.mrb[0].mxu0
    %v1968 = vadd.f32 %v1860, %v1967
    %v1969 = vpop.f32.mrb[0].mxu0
    %v1970 = vpop.f32.mrb[0].mxu0
    %v1971 = vadd.f32 %v1860, %v1970
    %v1972 = vpop.f32.mrb[0].mxu0
    %1973 = vmatprep.mubr.bf16.mxu0 0
    %1974 = vmatmul.mubr.bf16.gmra.mrb[0].mxu0 %v1827
    %v1975 = vpop.f32.mrb[0].mxu0
    %v1976 = vadd.f32 %v1860, %v1975
    %v1977 = vpop.f32.mrb[0].mxu0
    %v1978 = vpop.f32.mrb[0].mxu0
    %v1979 = vadd.f32 %v1860, %v1978
    %v1980 = vpop.f32.mrb[0].mxu0
    %1981 = vmatprep.mubr.bf16.mxu0 0
    %1982 = vmatmul.mubr.bf16.gmra.mrb[0].mxu0 %v1828
    %v1983 = vpop.f32.mrb[0].mxu0
    %v1984 = vadd.f32 %v1860, %v1983
    %v1985 = vpop.f32.mrb[0].mxu0
    %v1986 = vpop.f32.mrb[0].mxu0
    %v1987 = vadd.f32 %v1860, %v1986
    %v1988 = vpop.f32.mrb[0].mxu0
    %1989 = vmatprep.mubr.bf16.mxu0 0
    %1990 = vmatmul.mubr.bf16.gmra.mrb[0].mxu0 %v1829
    %v1991 = vpop.f32.mrb[0].mxu0
    %v1992 = vadd.f32 %v1860, %v1991
    %v1993 = vpop.f32.mrb[0].mxu0
    %v1994 = vpop.f32.mrb[0].mxu0
    %v1995 = vadd.f32 %v1860, %v1994
    %v1996 = vpop.f32.mrb[0].mxu0
    %1997 = vmatprep.mubr.bf16.mxu0 0
    %1998 = vmatmul.mubr.bf16.gmra.mrb[0].mxu0 %v1830
    %v1999 = vpop.f32.mrb[0].mxu0
    %v2000 = vadd.f32 %v1860, %v1999
    %v2001 = vpop.f32.mrb[0].mxu0
    %v2002 = vpop.f32.mrb[0].mxu0
    %v2003 = vadd.f32 %v1860, %v2002
    %v2004 = vpop.f32.mrb[0].mxu0
    %2005 = vmatprep.mubr.bf16.mxu0 0
    %2006 = vmatmul.mubr.bf16.gmra.mrb[0].mxu0 %v1831
    %v2007 = vpop.f32.mrb[0].mxu0
    %v2008 = vadd.f32 %v1860, %v2007
    %v2009 = vpop.f32.mrb[0].mxu0
    %v2010 = vpop.f32.mrb[0].mxu0
    %v2011 = vadd.f32 %v1860, %v2010
    %v2012 = vpop.f32.mrb[0].mxu0
    %2013 = vmatprep.mubr.bf16.mxu0 0
    %2014 = vmatmul.mubr.bf16.gmra.mrb[0].mxu0 %v1832
    %v2015 = vpop.f32.mrb[0].mxu0
    %v2016 = vadd.f32 %v1860, %v2015
    %v2017 = vpop.f32.mrb[0].mxu0
    %v2018 = vpop.f32.mrb[0].mxu0
    %v2019 = vadd.f32 %v1860, %v2018
    %v2020 = vpop.f32.mrb[0].mxu0
    %2021 = vmatprep.mubr.bf16.mxu0 0
    %2022 = vmatmul.mubr.bf16.gmra.mrb[0].mxu0 %v1833
    %v2023 = vpop.f32.mrb[0].mxu0
    %v2024 = vadd.f32 %v1860, %v2023
    %v2025 = vpop.f32.mrb[0].mxu0
    %v2026 = vpop.f32.mrb[0].mxu0
    %v2027 = vadd.f32 %v1860, %v2026
    %v2028 = vpop.f32.mrb[0].mxu0
    %2029 = vmatprep.mubr.bf16.mxu0 0
    %2030 = vmatmul.mubr.bf16.gmra.mrb[0].mxu0 %v1834
    %v2031 = vpop.f32.mrb[0].mxu0
    %v2032 = vadd.f32 %v1860, %v2031
    %v2033 = vpop.f32.mrb[0].mxu0
    %v2034 = vpop.f32.mrb[0].mxu0
    %v2035 = vadd.f32 %v1860, %v2034
    %v2036 = vpop.f32.mrb[0].mxu0
    %2037 = vmatprep.mubr.bf16.mxu0 0
    %2038 = vmatmul.mubr.bf16.gmra.mrb[0].mxu0 %v1835
    %v2039 = vpop.f32.mrb[0].mxu0
    %v2040 = vadd.f32 %v1860, %v2039
    %v2041 = vpop.f32.mrb[0].mxu0
    %v2042 = vpop.f32.mrb[0].mxu0
    %v2043 = vadd.f32 %v1860, %v2042
    %v2044 = vpop.f32.mrb[0].mxu0
    %2045 = vmatprep.mubr.bf16.mxu0 0
    %2046 = vmatmul.mubr.bf16.gmra.mrb[0].mxu0 %v1836
    %v2047 = vpop.f32.mrb[0].mxu0
    %v2048 = vadd.f32 %v1860, %v2047
    %v2049 = vpop.f32.mrb[0].mxu0
    %v2050 = vpop.f32.mrb[0].mxu0
    %v2051 = vadd.f32 %v1860, %v2050
    %v2052 = vpop.f32.mrb[0].mxu0
    %2053 = vmatprep.mubr.bf16.mxu0 0
    %2054 = vmatmul.mubr.bf16.gmra.mrb[0].mxu0 %v1837
    %v2055 = vpop.f32.mrb[0].mxu0
    %v2056 = vadd.f32 %v1860, %v2055
    %v2057 = vpop.f32.mrb[0].mxu0
    %v2058 = vpop.f32.mrb[0].mxu0
    %v2059 = vadd.f32 %v1860, %v2058
    %v2060 = vpop.f32.mrb[0].mxu0
    %2061 = vmatprep.mubr.bf16.mxu0 0
    %2062 = vmatmul.mubr.bf16.gmra.mrb[0].mxu0 %v1838
    %v2063 = vpop.f32.mrb[0].mxu0
    %v2064 = vadd.f32 %v1860, %v2063
    %v2065 = vpop.f32.mrb[0].mxu0
    %v2066 = vpop.f32.mrb[0].mxu0
    %v2067 = vadd.f32 %v1860, %v2066
    %v2068 = vpop.f32.mrb[0].mxu0
    %2069 = vdwg.mxu0
    %v2070 = vmax.f32 %v1944, 0.0
    %v2071 = vmax.f32 %v1947, 0.0
    %v2072 = vmax.f32 %v1952, 0.0
    %v2073 = vmax.f32 %v1955, 0.0
    %v2074 = vmax.f32 %v1960, 0.0
    %v2075 = vmax.f32 %v1963, 0.0
    %v2076 = vmax.f32 %v1968, 0.0
    %v2077 = vmax.f32 %v1971, 0.0
    %v2078 = vmax.f32 %v1976, 0.0
    %v2079 = vmax.f32 %v1979, 0.0
    %v2080 = vmax.f32 %v1984, 0.0
    %v2081 = vmax.f32 %v1987, 0.0
    %v2082 = vmax.f32 %v1992, 0.0
    %v2083 = vmax.f32 %v1995, 0.0
    %v2084 = vmax.f32 %v2000, 0.0
    %v2085 = vmax.f32 %v2003, 0.0
    %v2086 = vmax.f32 %v2008, 0.0
    %v2087 = vmax.f32 %v2011, 0.0
    %v2088 = vmax.f32 %v2016, 0.0
    %v2089 = vmax.f32 %v2019, 0.0
    %v2090 = vmax.f32 %v2024, 0.0
    %v2091 = vmax.f32 %v2027, 0.0
    %v2092 = vmax.f32 %v2032, 0.0
    %v2093 = vmax.f32 %v2035, 0.0
    %v2094 = vmax.f32 %v2040, 0.0
    %v2095 = vmax.f32 %v2043, 0.0
    %v2096 = vmax.f32 %v2048, 0.0
    %v2097 = vmax.f32 %v2051, 0.0
    %v2098 = vmax.f32 %v2056, 0.0
    %v2099 = vmax.f32 %v2059, 0.0
    %v2100 = vmax.f32 %v2064, 0.0
    %v2101 = vmax.f32 %v2067, 0.0
    %v2102 = vpack.c.bf16 %v2071, %v2070
    %v2103 = vpack.c.bf16 %v2073, %v2072
    %v2104 = vpack.c.bf16 %v2075, %v2074
    %v2105 = vpack.c.bf16 %v2077, %v2076
    %v2106 = vpack.c.bf16 %v2079, %v2078
    %v2107 = vpack.c.bf16 %v2081, %v2080
    %v2108 = vpack.c.bf16 %v2083, %v2082
    %v2109 = vpack.c.bf16 %v2085, %v2084
    %v2110 = vpack.c.bf16 %v2087, %v2086
    %v2111 = vpack.c.bf16 %v2089, %v2088
    %v2112 = vpack.c.bf16 %v2091, %v2090
    %v2113 = vpack.c.bf16 %v2093, %v2092
    %v2114 = vpack.c.bf16 %v2095, %v2094
    %v2115 = vpack.c.bf16 %v2097, %v2096
    %v2116 = vpack.c.bf16 %v2099, %v2098
    %v2117 = vpack.c.bf16 %v2101, %v2100
    %s2118 = scalar_lea.vmem [#allocation2], 384
    %v2119 = vld [vmem:[%s2118] sm:$0xf]
    %v2120 = vld [vmem:[%s2118 + $0x4] sm:$0xf]
    %v2121 = vld [vmem:[%s2118 + $0x8] sm:$0xf]
    %v2122 = vld [vmem:[%s2118 + $0xc] sm:$0xf]
    %v2123 = vld [vmem:[%s2118 + $0x10] sm:$0xf]
    %v2124 = vld [vmem:[%s2118 + $0x14] sm:$0xf]
    %v2125 = vld [vmem:[%s2118 + $0x18] sm:$0xf]
    %v2126 = vld [vmem:[%s2118 + $0x1c] sm:$0xf]
    %v2127 = vld [vmem:[%s2118 + $0x20] sm:$0xf]
    %v2128 = vld [vmem:[%s2118 + $0x24] sm:$0xf]
    %v2129 = vld [vmem:[%s2118 + $0x28] sm:$0xf]
    %v2130 = vld [vmem:[%s2118 + $0x2c] sm:$0xf]
    %v2131 = vld [vmem:[%s2118 + $0x30] sm:$0xf]
    %v2132 = vld [vmem:[%s2118 + $0x34] sm:$0xf]
    %v2133 = vld [vmem:[%s2118 + $0x38] sm:$0xf]
    %v2134 = vld [vmem:[%s2118 + $0x3c] sm:$0xf]
    %v2135 = vld [vmem:[%s4 + $0x7] sm:$0x1]
    %v2136 = vlaneseq
    %v2137 = vshrl.u32 %v2136, 7
    %v2138 = vsub.s32 0, %v2137
    %v2139 = vrot.slane %v2135, %v2138
    %v2156 = vunpack.c.l.b16 %v2119
    %v2157 = vunpack.c.l.b16 %v2120
    %v2158 = vunpack.c.l.b16 %v2121
    %v2159 = vunpack.c.l.b16 %v2122
    %v2160 = vunpack.c.l.b16 %v2123
    %v2161 = vunpack.c.l.b16 %v2124
    %v2162 = vunpack.c.l.b16 %v2125
    %v2163 = vunpack.c.l.b16 %v2126
    %v2164 = vunpack.c.l.b16 %v2127
    %v2165 = vunpack.c.l.b16 %v2128
    %v2166 = vunpack.c.l.b16 %v2129
    %v2167 = vunpack.c.l.b16 %v2130
    %v2168 = vunpack.c.l.b16 %v2131
    %v2169 = vunpack.c.l.b16 %v2132
    %v2170 = vunpack.c.l.b16 %v2133
    %v2171 = vunpack.c.l.b16 %v2134
    %v2172 = vpack.c.b16 %v2157, %v2156
    %v2173 = vpack.c.b16 %v2159, %v2158
    %v2174 = vpack.c.b16 %v2161, %v2160
    %v2175 = vpack.c.b16 %v2163, %v2162
    %v2176 = vpack.c.b16 %v2165, %v2164
    %v2177 = vpack.c.b16 %v2167, %v2166
    %v2178 = vpack.c.b16 %v2169, %v2168
    %v2179 = vpack.c.b16 %v2171, %v2170
    %2188 = vmatprep.subr.bf16.mxu0 0
    %2189 = vmatpush1.bf16.msra.mxu0 %v2172
    %2190 = vmatprep.subr.bf16.mxu0 0
    %2191 = vmatpush1.bf16.msra.mxu0 %v2173
    %2192 = vmatprep.subr.bf16.mxu0 0
    %2193 = vmatpush1.bf16.msra.mxu0 %v2174
    %2194 = vmatprep.subr.bf16.mxu0 0
    %2195 = vmatpush1.bf16.msra.mxu0 %v2175
    %2196 = vmatprep.subr.bf16.mxu0 0
    %2197 = vmatpush1.bf16.msra.mxu0 %v2176
    %2198 = vmatprep.subr.bf16.mxu0 0
    %2199 = vmatpush1.bf16.msra.mxu0 %v2177
    %2200 = vmatprep.subr.bf16.mxu0 0
    %2201 = vmatpush1.bf16.msra.mxu0 %v2178
    %2202 = vmatprep.subr.bf16.mxu0 0
    %2203 = vmatpush1.bf16.msra.mxu0 %v2179
    %2204 = vmatprep.subr.bf16.mxu0 0
    %2205 = vmatpush1.bf16.msra.mxu0 0
    %2206 = vmatprep.subr.bf16.mxu0 0
    %2207 = vmatpush1.bf16.msra.mxu0 0
    %2208 = vmatprep.subr.bf16.mxu0 0
    %2209 = vmatpush1.bf16.msra.mxu0 0
    %2210 = vmatprep.subr.bf16.mxu0 0
    %2211 = vmatpush1.bf16.msra.mxu0 0
    %2212 = vmatprep.subr.bf16.mxu0 0
    %2213 = vmatpush1.bf16.msra.mxu0 0
    %2214 = vmatprep.subr.bf16.mxu0 0
    %2215 = vmatpush1.bf16.msra.mxu0 0
    %2216 = vmatprep.subr.bf16.mxu0 0
    %2217 = vmatpush1.bf16.msra.mxu0 0
    %2218 = vmatprep.subr.bf16.mxu0 0
    %2219 = vmatpush1.bf16.msra.mxu0 0
    %2220 = vmatprep.mubr.bf16.mxu0 0
    %2221 = vmatmul.mubr.bf16.gmra.mrb[0].mxu0 %v2102
    %v2222 = vpop.f32.mrb[0].mxu0
    %v2223 = vadd.f32 %v2139, %v2222
    %v2224 = vpop.f32.mrb[0].mxu0
    %v2225 = vpop.f32.mrb[0].mxu0
    %v2226 = vadd.f32 %v2139, %v2225
    %v2227 = vpop.f32.mrb[0].mxu0
    %2228 = vmatprep.mubr.bf16.mxu0 0
    %2229 = vmatmul.mubr.bf16.gmra.mrb[0].mxu0 %v2103
    %v2230 = vpop.f32.mrb[0].mxu0
    %v2231 = vadd.f32 %v2139, %v2230
    %v2232 = vpop.f32.mrb[0].mxu0
    %v2233 = vpop.f32.mrb[0].mxu0
    %v2234 = vadd.f32 %v2139, %v2233
    %v2235 = vpop.f32.mrb[0].mxu0
    %2236 = vmatprep.mubr.bf16.mxu0 0
    %2237 = vmatmul.mubr.bf16.gmra.mrb[0].mxu0 %v2104
    %v2238 = vpop.f32.mrb[0].mxu0
    %v2239 = vadd.f32 %v2139, %v2238
    %v2240 = vpop.f32.mrb[0].mxu0
    %v2241 = vpop.f32.mrb[0].mxu0
    %v2242 = vadd.f32 %v2139, %v2241
    %v2243 = vpop.f32.mrb[0].mxu0
    %2244 = vmatprep.mubr.bf16.mxu0 0
    %2245 = vmatmul.mubr.bf16.gmra.mrb[0].mxu0 %v2105
    %v2246 = vpop.f32.mrb[0].mxu0
    %v2247 = vadd.f32 %v2139, %v2246
    %v2248 = vpop.f32.mrb[0].mxu0
    %v2249 = vpop.f32.mrb[0].mxu0
    %v2250 = vadd.f32 %v2139, %v2249
    %v2251 = vpop.f32.mrb[0].mxu0
    %2252 = vmatprep.mubr.bf16.mxu0 0
    %2253 = vmatmul.mubr.bf16.gmra.mrb[0].mxu0 %v2106
    %v2254 = vpop.f32.mrb[0].mxu0
    %v2255 = vadd.f32 %v2139, %v2254
    %v2256 = vpop.f32.mrb[0].mxu0
    %v2257 = vpop.f32.mrb[0].mxu0
    %v2258 = vadd.f32 %v2139, %v2257
    %v2259 = vpop.f32.mrb[0].mxu0
    %2260 = vmatprep.mubr.bf16.mxu0 0
    %2261 = vmatmul.mubr.bf16.gmra.mrb[0].mxu0 %v2107
    %v2262 = vpop.f32.mrb[0].mxu0
    %v2263 = vadd.f32 %v2139, %v2262
    %v2264 = vpop.f32.mrb[0].mxu0
    %v2265 = vpop.f32.mrb[0].mxu0
    %v2266 = vadd.f32 %v2139, %v2265
    %v2267 = vpop.f32.mrb[0].mxu0
    %2268 = vmatprep.mubr.bf16.mxu0 0
    %2269 = vmatmul.mubr.bf16.gmra.mrb[0].mxu0 %v2108
    %v2270 = vpop.f32.mrb[0].mxu0
    %v2271 = vadd.f32 %v2139, %v2270
    %v2272 = vpop.f32.mrb[0].mxu0
    %v2273 = vpop.f32.mrb[0].mxu0
    %v2274 = vadd.f32 %v2139, %v2273
    %v2275 = vpop.f32.mrb[0].mxu0
    %2276 = vmatprep.mubr.bf16.mxu0 0
    %2277 = vmatmul.mubr.bf16.gmra.mrb[0].mxu0 %v2109
    %v2278 = vpop.f32.mrb[0].mxu0
    %v2279 = vadd.f32 %v2139, %v2278
    %v2280 = vpop.f32.mrb[0].mxu0
    %v2281 = vpop.f32.mrb[0].mxu0
    %v2282 = vadd.f32 %v2139, %v2281
    %v2283 = vpop.f32.mrb[0].mxu0
    %2284 = vmatprep.mubr.bf16.mxu0 0
    %2285 = vmatmul.mubr.bf16.gmra.mrb[0].mxu0 %v2110
    %v2286 = vpop.f32.mrb[0].mxu0
    %v2287 = vadd.f32 %v2139, %v2286
    %v2288 = vpop.f32.mrb[0].mxu0
    %v2289 = vpop.f32.mrb[0].mxu0
    %v2290 = vadd.f32 %v2139, %v2289
    %v2291 = vpop.f32.mrb[0].mxu0
    %2292 = vmatprep.mubr.bf16.mxu0 0
    %2293 = vmatmul.mubr.bf16.gmra.mrb[0].mxu0 %v2111
    %v2294 = vpop.f32.mrb[0].mxu0
    %v2295 = vadd.f32 %v2139, %v2294
    %v2296 = vpop.f32.mrb[0].mxu0
    %v2297 = vpop.f32.mrb[0].mxu0
    %v2298 = vadd.f32 %v2139, %v2297
    %v2299 = vpop.f32.mrb[0].mxu0
    %2300 = vmatprep.mubr.bf16.mxu0 0
    %2301 = vmatmul.mubr.bf16.gmra.mrb[0].mxu0 %v2112
    %v2302 = vpop.f32.mrb[0].mxu0
    %v2303 = vadd.f32 %v2139, %v2302
    %v2304 = vpop.f32.mrb[0].mxu0
    %v2305 = vpop.f32.mrb[0].mxu0
    %v2306 = vadd.f32 %v2139, %v2305
    %v2307 = vpop.f32.mrb[0].mxu0
    %2308 = vmatprep.mubr.bf16.mxu0 0
    %2309 = vmatmul.mubr.bf16.gmra.mrb[0].mxu0 %v2113
    %v2310 = vpop.f32.mrb[0].mxu0
    %v2311 = vadd.f32 %v2139, %v2310
    %v2312 = vpop.f32.mrb[0].mxu0
    %v2313 = vpop.f32.mrb[0].mxu0
    %v2314 = vadd.f32 %v2139, %v2313
    %v2315 = vpop.f32.mrb[0].mxu0
    %2316 = vmatprep.mubr.bf16.mxu0 0
    %2317 = vmatmul.mubr.bf16.gmra.mrb[0].mxu0 %v2114
    %v2318 = vpop.f32.mrb[0].mxu0
    %v2319 = vadd.f32 %v2139, %v2318
    %v2320 = vpop.f32.mrb[0].mxu0
    %v2321 = vpop.f32.mrb[0].mxu0
    %v2322 = vadd.f32 %v2139, %v2321
    %v2323 = vpop.f32.mrb[0].mxu0
    %2324 = vmatprep.mubr.bf16.mxu0 0
    %2325 = vmatmul.mubr.bf16.gmra.mrb[0].mxu0 %v2115
    %v2326 = vpop.f32.mrb[0].mxu0
    %v2327 = vadd.f32 %v2139, %v2326
    %v2328 = vpop.f32.mrb[0].mxu0
    %v2329 = vpop.f32.mrb[0].mxu0
    %v2330 = vadd.f32 %v2139, %v2329
    %v2331 = vpop.f32.mrb[0].mxu0
    %2332 = vmatprep.mubr.bf16.mxu0 0
    %2333 = vmatmul.mubr.bf16.gmra.mrb[0].mxu0 %v2116
    %v2334 = vpop.f32.mrb[0].mxu0
    %v2335 = vadd.f32 %v2139, %v2334
    %v2336 = vpop.f32.mrb[0].mxu0
    %v2337 = vpop.f32.mrb[0].mxu0
    %v2338 = vadd.f32 %v2139, %v2337
    %v2339 = vpop.f32.mrb[0].mxu0
    %2340 = vmatprep.mubr.bf16.mxu0 0
    %2341 = vmatmul.mubr.bf16.gmra.mrb[0].mxu0 %v2117
    %v2342 = vpop.f32.mrb[0].mxu0
    %v2343 = vadd.f32 %v2139, %v2342
    %v2344 = vpop.f32.mrb[0].mxu0
    %v2345 = vpop.f32.mrb[0].mxu0
    %v2346 = vadd.f32 %v2139, %v2345
    %v2347 = vpop.f32.mrb[0].mxu0
    %2348 = vdwg.mxu0
    %v2349 = vmax.f32 %v2223, 0.0
    %v2350 = vmax.f32 %v2226, 0.0
    %v2351 = vmax.f32 %v2231, 0.0
    %v2352 = vmax.f32 %v2234, 0.0
    %v2353 = vmax.f32 %v2239, 0.0
    %v2354 = vmax.f32 %v2242, 0.0
    %v2355 = vmax.f32 %v2247, 0.0
    %v2356 = vmax.f32 %v2250, 0.0
    %v2357 = vmax.f32 %v2255, 0.0
    %v2358 = vmax.f32 %v2258, 0.0
    %v2359 = vmax.f32 %v2263, 0.0
    %v2360 = vmax.f32 %v2266, 0.0
    %v2361 = vmax.f32 %v2271, 0.0
    %v2362 = vmax.f32 %v2274, 0.0
    %v2363 = vmax.f32 %v2279, 0.0
    %v2364 = vmax.f32 %v2282, 0.0
    %v2365 = vmax.f32 %v2287, 0.0
    %v2366 = vmax.f32 %v2290, 0.0
    %v2367 = vmax.f32 %v2295, 0.0
    %v2368 = vmax.f32 %v2298, 0.0
    %v2369 = vmax.f32 %v2303, 0.0
    %v2370 = vmax.f32 %v2306, 0.0
    %v2371 = vmax.f32 %v2311, 0.0
    %v2372 = vmax.f32 %v2314, 0.0
    %v2373 = vmax.f32 %v2319, 0.0
    %v2374 = vmax.f32 %v2322, 0.0
    %v2375 = vmax.f32 %v2327, 0.0
    %v2376 = vmax.f32 %v2330, 0.0
    %v2377 = vmax.f32 %v2335, 0.0
    %v2378 = vmax.f32 %v2338, 0.0
    %v2379 = vmax.f32 %v2343, 0.0
    %v2380 = vmax.f32 %v2346, 0.0
    %v2381 = vpack.c.bf16 %v2350, %v2349
    %v2382 = vpack.c.bf16 %v2352, %v2351
    %v2383 = vpack.c.bf16 %v2354, %v2353
    %v2384 = vpack.c.bf16 %v2356, %v2355
    %v2385 = vpack.c.bf16 %v2358, %v2357
    %v2386 = vpack.c.bf16 %v2360, %v2359
    %v2387 = vpack.c.bf16 %v2362, %v2361
    %v2388 = vpack.c.bf16 %v2364, %v2363
    %v2389 = vpack.c.bf16 %v2366, %v2365
    %v2390 = vpack.c.bf16 %v2368, %v2367
    %v2391 = vpack.c.bf16 %v2370, %v2369
    %v2392 = vpack.c.bf16 %v2372, %v2371
    %v2393 = vpack.c.bf16 %v2374, %v2373
    %v2394 = vpack.c.bf16 %v2376, %v2375
    %v2395 = vpack.c.bf16 %v2378, %v2377
    %v2396 = vpack.c.bf16 %v2380, %v2379
    %v2397 = vld [vmem:[%s3] sm:$0xf]
    %v2398 = vld [vmem:[%s3 + $0x4] sm:$0xf]
    %v2399 = vld [vmem:[%s3 + $0x8] sm:$0xf]
    %v2400 = vld [vmem:[%s3 + $0xc] sm:$0xf]
    %v2401 = vld [vmem:[%s3 + $0x10] sm:$0xf]
    %v2402 = vld [vmem:[%s3 + $0x14] sm:$0xf]
    %v2403 = vld [vmem:[%s3 + $0x18] sm:$0xf]
    %v2404 = vld [vmem:[%s3 + $0x1c] sm:$0xf]
    %v2405 = vld [vmem:[%s3 + $0x20] sm:$0xf]
    %v2406 = vld [vmem:[%s3 + $0x24] sm:$0xf]
    %v2407 = vld [vmem:[%s3 + $0x28] sm:$0xf]
    %v2408 = vld [vmem:[%s3 + $0x2c] sm:$0xf]
    %v2409 = vld [vmem:[%s3 + $0x30] sm:$0xf]
    %v2410 = vld [vmem:[%s3 + $0x34] sm:$0xf]
    %v2411 = vld [vmem:[%s3 + $0x38] sm:$0xf]
    %v2412 = vld [vmem:[%s3 + $0x3c] sm:$0xf]
    %v2413 = vld [vmem:[%s5] sm:$0x1]
    %v2415 = vlaneseq
    %v2416 = vshrl.u32 %v2415, 7
    %v2417 = vsub.s32 0, %v2416
    %v2418 = vrot.slane %v2413, %v2417
    %v2436 = vunpack.c.l.b16 %v2397
    %v2437 = vunpack.c.l.b16 %v2398
    %v2438 = vunpack.c.l.b16 %v2399
    %v2439 = vunpack.c.l.b16 %v2400
    %v2440 = vunpack.c.l.b16 %v2401
    %v2441 = vunpack.c.l.b16 %v2402
    %v2442 = vunpack.c.l.b16 %v2403
    %v2443 = vunpack.c.l.b16 %v2404
    %v2444 = vunpack.c.l.b16 %v2405
    %v2445 = vunpack.c.l.b16 %v2406
    %v2446 = vunpack.c.l.b16 %v2407
    %v2447 = vunpack.c.l.b16 %v2408
    %v2448 = vunpack.c.l.b16 %v2409
    %v2449 = vunpack.c.l.b16 %v2410
    %v2450 = vunpack.c.l.b16 %v2411
    %v2451 = vunpack.c.l.b16 %v2412
    %v2452 = vpack.c.b16 %v2437, %v2436
    %v2453 = vpack.c.b16 %v2439, %v2438
    %v2454 = vpack.c.b16 %v2441, %v2440
    %v2455 = vpack.c.b16 %v2443, %v2442
    %v2456 = vpack.c.b16 %v2445, %v2444
    %v2457 = vpack.c.b16 %v2447, %v2446
    %v2458 = vpack.c.b16 %v2449, %v2448
    %v2459 = vpack.c.b16 %v2451, %v2450
    %2468 = vmatprep.subr.bf16.mxu0 0
    %2469 = vmatpush1.bf16.msra.mxu0 %v2452
    %2470 = vmatprep.subr.bf16.mxu0 0
    %2471 = vmatpush1.bf16.msra.mxu0 %v2453
    %2472 = vmatprep.subr.bf16.mxu0 0
    %2473 = vmatpush1.bf16.msra.mxu0 %v2454
    %2474 = vmatprep.subr.bf16.mxu0 0
    %2475 = vmatpush1.bf16.msra.mxu0 %v2455
    %2476 = vmatprep.subr.bf16.mxu0 0
    %2477 = vmatpush1.bf16.msra.mxu0 %v2456
    %2478 = vmatprep.subr.bf16.mxu0 0
    %2479 = vmatpush1.bf16.msra.mxu0 %v2457
    %2480 = vmatprep.subr.bf16.mxu0 0
    %2481 = vmatpush1.bf16.msra.mxu0 %v2458
    %2482 = vmatprep.subr.bf16.mxu0 0
    %2483 = vmatpush1.bf16.msra.mxu0 %v2459
    %2484 = vmatprep.subr.bf16.mxu0 0
    %2485 = vmatpush1.bf16.msra.mxu0 0
    %2486 = vmatprep.subr.bf16.mxu0 0
    %2487 = vmatpush1.bf16.msra.mxu0 0
    %2488 = vmatprep.subr.bf16.mxu0 0
    %2489 = vmatpush1.bf16.msra.mxu0 0
    %2490 = vmatprep.subr.bf16.mxu0 0
    %2491 = vmatpush1.bf16.msra.mxu0 0
    %2492 = vmatprep.subr.bf16.mxu0 0
    %2493 = vmatpush1.bf16.msra.mxu0 0
    %2494 = vmatprep.subr.bf16.mxu0 0
    %2495 = vmatpush1.bf16.msra.mxu0 0
    %2496 = vmatprep.subr.bf16.mxu0 0
    %2497 = vmatpush1.bf16.msra.mxu0 0
    %2498 = vmatprep.subr.bf16.mxu0 0
    %2499 = vmatpush1.bf16.msra.mxu0 0
    %2500 = vmatprep.mubr.bf16.mxu0 0
    %2501 = vmatmul.mubr.bf16.gmra.mrb[0].mxu0 %v2381
    %v2502 = vpop.f32.mrb[0].mxu0
    %v2503 = vadd.f32 %v2418, %v2502
    %v2504 = vpop.f32.mrb[0].mxu0
    %v2505 = vpop.f32.mrb[0].mxu0
    %v2506 = vadd.f32 %v2418, %v2505
    %v2507 = vpop.f32.mrb[0].mxu0
    %2508 = vmatprep.mubr.bf16.mxu0 0
    %2509 = vmatmul.mubr.bf16.gmra.mrb[0].mxu0 %v2382
    %v2510 = vpop.f32.mrb[0].mxu0
    %v2511 = vadd.f32 %v2418, %v2510
    %v2512 = vpop.f32.mrb[0].mxu0
    %v2513 = vpop.f32.mrb[0].mxu0
    %v2514 = vadd.f32 %v2418, %v2513
    %v2515 = vpop.f32.mrb[0].mxu0
    %2516 = vmatprep.mubr.bf16.mxu0 0
    %2517 = vmatmul.mubr.bf16.gmra.mrb[0].mxu0 %v2383
    %v2518 = vpop.f32.mrb[0].mxu0
    %v2519 = vadd.f32 %v2418, %v2518
    %v2520 = vpop.f32.mrb[0].mxu0
    %v2521 = vpop.f32.mrb[0].mxu0
    %v2522 = vadd.f32 %v2418, %v2521
    %v2523 = vpop.f32.mrb[0].mxu0
    %2524 = vmatprep.mubr.bf16.mxu0 0
    %2525 = vmatmul.mubr.bf16.gmra.mrb[0].mxu0 %v2384
    %v2526 = vpop.f32.mrb[0].mxu0
    %v2527 = vadd.f32 %v2418, %v2526
    %v2528 = vpop.f32.mrb[0].mxu0
    %v2529 = vpop.f32.mrb[0].mxu0
    %v2530 = vadd.f32 %v2418, %v2529
    %v2531 = vpop.f32.mrb[0].mxu0
    %2532 = vmatprep.mubr.bf16.mxu0 0
    %2533 = vmatmul.mubr.bf16.gmra.mrb[0].mxu0 %v2385
    %v2534 = vpop.f32.mrb[0].mxu0
    %v2535 = vadd.f32 %v2418, %v2534
    %v2536 = vpop.f32.mrb[0].mxu0
    %v2537 = vpop.f32.mrb[0].mxu0
    %v2538 = vadd.f32 %v2418, %v2537
    %v2539 = vpop.f32.mrb[0].mxu0
    %2540 = vmatprep.mubr.bf16.mxu0 0
    %2541 = vmatmul.mubr.bf16.gmra.mrb[0].mxu0 %v2386
    %v2542 = vpop.f32.mrb[0].mxu0
    %v2543 = vadd.f32 %v2418, %v2542
    %v2544 = vpop.f32.mrb[0].mxu0
    %v2545 = vpop.f32.mrb[0].mxu0
    %v2546 = vadd.f32 %v2418, %v2545
    %v2547 = vpop.f32.mrb[0].mxu0
    %2548 = vmatprep.mubr.bf16.mxu0 0
    %2549 = vmatmul.mubr.bf16.gmra.mrb[0].mxu0 %v2387
    %v2550 = vpop.f32.mrb[0].mxu0
    %v2551 = vadd.f32 %v2418, %v2550
    %v2552 = vpop.f32.mrb[0].mxu0
    %v2553 = vpop.f32.mrb[0].mxu0
    %v2554 = vadd.f32 %v2418, %v2553
    %v2555 = vpop.f32.mrb[0].mxu0
    %2556 = vmatprep.mubr.bf16.mxu0 0
    %2557 = vmatmul.mubr.bf16.gmra.mrb[0].mxu0 %v2388
    %v2558 = vpop.f32.mrb[0].mxu0
    %v2559 = vadd.f32 %v2418, %v2558
    %v2560 = vpop.f32.mrb[0].mxu0
    %v2561 = vpop.f32.mrb[0].mxu0
    %v2562 = vadd.f32 %v2418, %v2561
    %v2563 = vpop.f32.mrb[0].mxu0
    %2564 = vmatprep.mubr.bf16.mxu0 0
    %2565 = vmatmul.mubr.bf16.gmra.mrb[0].mxu0 %v2389
    %v2566 = vpop.f32.mrb[0].mxu0
    %v2567 = vadd.f32 %v2418, %v2566
    %v2568 = vpop.f32.mrb[0].mxu0
    %v2569 = vpop.f32.mrb[0].mxu0
    %v2570 = vadd.f32 %v2418, %v2569
    %v2571 = vpop.f32.mrb[0].mxu0
    %2572 = vmatprep.mubr.bf16.mxu0 0
    %2573 = vmatmul.mubr.bf16.gmra.mrb[0].mxu0 %v2390
    %v2574 = vpop.f32.mrb[0].mxu0
    %v2575 = vadd.f32 %v2418, %v2574
    %v2576 = vpop.f32.mrb[0].mxu0
    %v2577 = vpop.f32.mrb[0].mxu0
    %v2578 = vadd.f32 %v2418, %v2577
    %v2579 = vpop.f32.mrb[0].mxu0
    %2580 = vmatprep.mubr.bf16.mxu0 0
    %2581 = vmatmul.mubr.bf16.gmra.mrb[0].mxu0 %v2391
    %v2582 = vpop.f32.mrb[0].mxu0
    %v2583 = vadd.f32 %v2418, %v2582
    %v2584 = vpop.f32.mrb[0].mxu0
    %v2585 = vpop.f32.mrb[0].mxu0
    %v2586 = vadd.f32 %v2418, %v2585
    %v2587 = vpop.f32.mrb[0].mxu0
    %2588 = vmatprep.mubr.bf16.mxu0 0
    %2589 = vmatmul.mubr.bf16.gmra.mrb[0].mxu0 %v2392
    %v2590 = vpop.f32.mrb[0].mxu0
    %v2591 = vadd.f32 %v2418, %v2590
    %v2592 = vpop.f32.mrb[0].mxu0
    %v2593 = vpop.f32.mrb[0].mxu0
    %v2594 = vadd.f32 %v2418, %v2593
    %v2595 = vpop.f32.mrb[0].mxu0
    %2596 = vmatprep.mubr.bf16.mxu0 0
    %2597 = vmatmul.mubr.bf16.gmra.mrb[0].mxu0 %v2393
    %v2598 = vpop.f32.mrb[0].mxu0
    %v2599 = vadd.f32 %v2418, %v2598
    %v2600 = vpop.f32.mrb[0].mxu0
    %v2601 = vpop.f32.mrb[0].mxu0
    %v2602 = vadd.f32 %v2418, %v2601
    %v2603 = vpop.f32.mrb[0].mxu0
    %2604 = vmatprep.mubr.bf16.mxu0 0
    %2605 = vmatmul.mubr.bf16.gmra.mrb[0].mxu0 %v2394
    %v2606 = vpop.f32.mrb[0].mxu0
    %v2607 = vadd.f32 %v2418, %v2606
    %v2608 = vpop.f32.mrb[0].mxu0
    %v2609 = vpop.f32.mrb[0].mxu0
    %v2610 = vadd.f32 %v2418, %v2609
    %v2611 = vpop.f32.mrb[0].mxu0
    %2612 = vmatprep.mubr.bf16.mxu0 0
    %2613 = vmatmul.mubr.bf16.gmra.mrb[0].mxu0 %v2395
    %v2614 = vpop.f32.mrb[0].mxu0
    %v2615 = vadd.f32 %v2418, %v2614
    %v2616 = vpop.f32.mrb[0].mxu0
    %v2617 = vpop.f32.mrb[0].mxu0
    %v2618 = vadd.f32 %v2418, %v2617
    %v2619 = vpop.f32.mrb[0].mxu0
    %2620 = vmatprep.mubr.bf16.mxu0 0
    %2621 = vmatmul.mubr.bf16.gmra.mrb[0].mxu0 %v2396
    %v2622 = vpop.f32.mrb[0].mxu0
    %v2623 = vadd.f32 %v2418, %v2622
    %v2624 = vpop.f32.mrb[0].mxu0
    %v2625 = vpop.f32.mrb[0].mxu0
    %v2626 = vadd.f32 %v2418, %v2625
    %v2627 = vpop.f32.mrb[0].mxu0
    %2628 = vdwg.mxu0
    %2629 = vst [vmem:[#allocation5] sm:$0xff] %v2503
    %2630 = vst [vmem:[#allocation5 + $0x8] sm:$0xff] %v2506
    %2631 = vst [vmem:[#allocation5 + $0x10] sm:$0xff] %v2511
    %2632 = vst [vmem:[#allocation5 + $0x18] sm:$0xff] %v2514
    %2633 = vst [vmem:[#allocation5 + $0x20] sm:$0xff] %v2519
    %2634 = vst [vmem:[#allocation5 + $0x28] sm:$0xff] %v2522
    %2635 = vst [vmem:[#allocation5 + $0x30] sm:$0xff] %v2527
    %2636 = vst [vmem:[#allocation5 + $0x38] sm:$0xff] %v2530
    %2637 = vst [vmem:[#allocation5 + $0x40] sm:$0xff] %v2535
    %2638 = vst [vmem:[#allocation5 + $0x48] sm:$0xff] %v2538
    %2639 = vst [vmem:[#allocation5 + $0x50] sm:$0xff] %v2543
    %2640 = vst [vmem:[#allocation5 + $0x58] sm:$0xff] %v2546
    %2641 = vst [vmem:[#allocation5 + $0x60] sm:$0xff] %v2551
    %2642 = vst [vmem:[#allocation5 + $0x68] sm:$0xff] %v2554
    %2643 = vst [vmem:[#allocation5 + $0x70] sm:$0xff] %v2559
    %2644 = vst [vmem:[#allocation5 + $0x78] sm:$0xff] %v2562
    %2645 = vst [vmem:[#allocation5 + $0x80] sm:$0xff] %v2567
    %2646 = vst [vmem:[#allocation5 + $0x88] sm:$0xff] %v2570
    %2647 = vst [vmem:[#allocation5 + $0x90] sm:$0xff] %v2575
    %2648 = vst [vmem:[#allocation5 + $0x98] sm:$0xff] %v2578
    %2649 = vst [vmem:[#allocation5 + $0xa0] sm:$0xff] %v2583
    %2650 = vst [vmem:[#allocation5 + $0xa8] sm:$0xff] %v2586
    %2651 = vst [vmem:[#allocation5 + $0xb0] sm:$0xff] %v2591
    %2652 = vst [vmem:[#allocation5 + $0xb8] sm:$0xff] %v2594
    %2653 = vst [vmem:[#allocation5 + $0xc0] sm:$0xff] %v2599
    %2654 = vst [vmem:[#allocation5 + $0xc8] sm:$0xff] %v2602
    %2655 = vst [vmem:[#allocation5 + $0xd0] sm:$0xff] %v2607
    %2656 = vst [vmem:[#allocation5 + $0xd8] sm:$0xff] %v2610
    %2657 = vst [vmem:[#allocation5 + $0xe0] sm:$0xff] %v2615
    %2658 = vst [vmem:[#allocation5 + $0xe8] sm:$0xff] %v2618
    %2659 = vst [vmem:[#allocation5 + $0xf0] sm:$0xff] %v2623
    %2660 = vst [vmem:[#allocation5 + $0xf8] sm:$0xff] %v2626
    // Predicated region
    $region30: #{ae_forward.1} parent=1 // pred_check
      _
    $region31: #{ae_forward.1} parent=1 // pred_check_branch
      %2662 = sbr.rel (0) target = $region33
    $region32: #{ae_forward.1} parent=1 // pred_region
      %s2664 = ssub.s32 4096, 4096
      %2665 = vsyncadd [#allocation4], %s2664
      %s2666 = sshll.u32 [#allocation5], 4
      %s2667 = int_to_ptr.vmem [resolvable:$true] %s2666
      %2672 = dma.vmem_to_hbm [thread:$0]  %s2667, 4096, %s6, [#allocation4], 128, 128, 8
    $region33: #{ae_forward.1} parent=1 // pred_fallthru
      _
    // Predicated region
    $region34: #{ae_forward.1} parent=1 // pred_check
      _
    $region35: #{ae_forward.1} parent=1 // pred_check_branch
      %2674 = sbr.rel (0) target = $region37
    $region36: #{ae_forward.1} parent=1 // pred_region
      %2675 = dma.done [#allocation4], 4096
    $region37: #{ae_forward.1} parent=1 // pred_fallthru
      _
    %2676 = vsyncpa [#allocation3], 1
    %2677 = vsyncpa [#allocation4], 1

</llo_original>
